<compile_context>
chip_gen: v7x
topology: tpu7x:2x2x1
jax: 0.10.0
libtpu: 0.0.40
codegen_flags: <defaults>
</compile_context>

<pallas_src>
import functools

import jax
import jax.numpy as jnp
from jax import lax
from jax.experimental import pallas as pl
from jax.experimental.pallas import tpu as pltpu


# ----------------------------------------------------------------------------
# Fused GCN2 forward kernel
# ----------------------------------------------------------------------------
def _gcn2_fused_kernel(adj_ref, x_ref, w1_ref, b1_ref, w2_ref, b2_ref, oc_ref,
                       h_out_ref, alpha_out_ref, *, num_tl, num_t, out_pad):
    f32 = jnp.float32
    bf16 = jnp.bfloat16
    num_g = num_tl + num_t  # width of the one-hot part (test-mask column is at index num_g)

    def graph_conv(h_bf16, w_ref, b_ref, apply_relu):
        # Refs are read at point of use (nothing hoisted): adj is the biggest tile and
        # must not stay live across the JJ_Norm stats between the two layers.
        # bf16 operands feed the MXU; accumulation + bias + relu stay f32.
        hw = jnp.dot(h_bf16, w_ref[...], preferred_element_type=f32)
        out = jnp.dot(adj_ref[...], hw.astype(bf16), preferred_element_type=f32) + b_ref[...]
        if apply_relu:
            out = jnp.maximum(out, 0.0)
        return out

    def jj_alpha(h):
        # h: [N, F] f32.  All statistics from three node-contracted MXU matmuls.
        n, feat = h.shape
        oc = oc_ref[...]                        # [N, TL+T+1] = [tl-onehot | t-onehot | test-mask]

        # (1) every group SUM in one matmul (reference never divides these by counts).
        sums = lax.dot_general(oc, h, (((0,), (0,)), ((), ())),
                               preferred_element_type=f32)        # [TL+T+1, F]
        sum_tl = sums[:num_tl]                  # [TL, F] per-(time,label) train sums
        sum_t = sums[num_tl:num_g]              # [T, F]  per-time train sums
        test_sum = sums[num_g:num_g + 1]        # [1, F]  test "mean" (really a sum)

        # (2) gather both per-node group sums with ONE block-diagonal matmul -> [N, 2F].
        bd = jnp.concatenate(
            [jnp.concatenate([sum_tl, jnp.zeros_like(sum_tl)], axis=1),
             jnp.concatenate([jnp.zeros_like(sum_t), sum_t], axis=1),
             jnp.zeros((1, 2 * feat), f32)], axis=0)              # [TL+T+1, 2F]
        means = jnp.dot(oc, bd, preferred_element_type=f32)       # [N, 2F]
        mean_u = means[:, :feat]
        tmean_u = means[:, feat:]

        # (3) one wide stats matmul contracting over nodes:
        #     lhs = [time-onehot (train only) | test-mask]                      [N, T+1]
        #     rhs = [(h-mean)^2 | (mean-tmean)^2 | (h-test_sum)^2 | 1]          [N, 3F+1]
        #     rows 0..T-1 -> rsq / msq / train_time_cnt, row T -> test_var / test_cnt.
        lhs = oc[:, num_tl:]
        rhs = jnp.concatenate([(h - mean_u) ** 2,
                               (mean_u - tmean_u) ** 2,
                               (h - test_sum) ** 2,
                               jnp.ones((n, 1), f32)], axis=1)
        stats = lax.dot_general(lhs, rhs, (((0,), (0,)), ((), ())),
                                preferred_element_type=f32)       # [T+1, 3F+1]

        rsq = jnp.sum(stats[:num_t, 0:feat], axis=1, keepdims=True)           # [T, 1]
        msq = jnp.sum(stats[:num_t, feat:2 * feat], axis=1, keepdims=True)    # [T, 1]
        ttc = stats[:num_t, 3 * feat:3 * feat + 1]                            # [T, 1]
        test_var = jnp.sum(stats[num_t:, 2 * feat:3 * feat])
        test_cnt = jnp.sum(stats[num_t:, 3 * feat:3 * feat + 1])

        test_var = test_var / jnp.maximum(1.0, test_cnt - 1.0)
        denom = jnp.maximum(1.0, ttc - 1.0)
        rsq = rsq / denom
        msq = msq / denom
        alpha_sq = (test_var - msq) / jnp.maximum(1e-6, rsq)
        alpha = jnp.where(alpha_sq > 0.0, jnp.sqrt(jnp.maximum(alpha_sq, 0.0)), 0.0)
        return alpha                                              # [T, 1]

    # layer 0: GraphConv(in -> hid, activation=relu), then JJ_Norm (stats only).
    h1 = graph_conv(x_ref[...], w1_ref, b1_ref, apply_relu=True)
    alpha1 = jj_alpha(h1)
    # dropout(0.5): eval-mode identity; JJ_Norm feature rewrite is a no-op passthrough.
    # layer 1: GraphConv(hid -> out), then JJ_Norm (stats only).
    h2 = graph_conv(h1.astype(bf16), w2_ref, b2_ref, apply_relu=False)
    alpha2 = jj_alpha(h2)

    # Lane-dense store: OUT < 128 would make every h-store a masked partial vst, so
    # zero-pad to a multiple of 128 lanes; the wrapper slices the real columns back.
    n_nodes, out_f = h2.shape
    if out_pad > out_f:
        h2 = jnp.concatenate([h2, jnp.zeros((n_nodes, out_pad - out_f), f32)], axis=1)
    h_out_ref[...] = h2.astype(h_out_ref.dtype)
    alpha_out_ref[...] = jnp.concatenate([alpha1, alpha2], axis=1).astype(alpha_out_ref.dtype)


# ----------------------------------------------------------------------------
# Wrapper: one fused pallas_call for the whole GCN2 forward
# ----------------------------------------------------------------------------
def gcn2_forward(adj_hat, features, params, onehot_tl, onehot_t, test_mask):
    w1, b1, w2, b2 = params
    n, in_f = features.shape
    hid_f = w1.shape[1]
    out_f = w2.shape[1]
    num_tl = onehot_tl.shape[1]
    num_t = onehot_t.shape[1]
    out_pad = max(128, ((out_f + 127) // 128) * 128)

    # Single stacked node-group matrix (only one orientation is shipped; the kernel
    # contracts over the node axis with lax.dot_general — no pre-transposed copies).
    oc = jnp.concatenate([onehot_tl, onehot_t, test_mask], axis=1).astype(jnp.float32)

    # bf16 operands for the MXU; stats / elementwise math stay f32 inside the kernel.
    adj_bf = adj_hat.astype(jnp.bfloat16)
    x_bf = features.astype(jnp.bfloat16)
    w1_bf = w1.astype(jnp.bfloat16)
    w2_bf = w2.astype(jnp.bfloat16)
    b1_f32 = b1.astype(jnp.float32)
    b2_f32 = b2.astype(jnp.float32)

    # Advisory cost estimate so XLA schedules the surrounding ops sensibly.
    g1 = num_tl + num_t + 1
    flops = 2 * n * (in_f * hid_f + n * hid_f + hid_f * out_f + n * out_f)
    for feat in (hid_f, out_f):
        flops += 2 * n * g1 * feat                      # group sums
        flops += 2 * n * g1 * 2 * feat                  # block-diag gather
        flops += 2 * n * (num_t + 1) * (3 * feat + 1)   # wide stats matmul
    bytes_accessed = sum(int(a.size) * a.dtype.itemsize
                         for a in (adj_bf, x_bf, w1_bf, b1_f32, w2_bf, b2_f32, oc))
    bytes_accessed += n * out_pad * 4 + num_t * 2 * 4

    vmem = pl.BlockSpec(memory_space=pltpu.MemorySpace.VMEM)
    kernel = functools.partial(_gcn2_fused_kernel,
                               num_tl=num_tl, num_t=num_t, out_pad=out_pad)

    h_pad, alpha_pair = pl.pallas_call(
        kernel,
        in_specs=[vmem] * 7,
        out_specs=(vmem, vmem),
        out_shape=(
            jax.ShapeDtypeStruct((n, out_pad), jnp.float32),
            jax.ShapeDtypeStruct((num_t, 2), jnp.float32),
        ),
        compiler_params=pltpu.CompilerParams(vmem_limit_bytes=32 * 1024 * 1024),
        cost_estimate=pl.CostEstimate(flops=int(flops),
                                      transcendentals=int(2 * num_t),
                                      bytes_accessed=int(bytes_accessed)),
    )(adj_bf, x_bf, w1_bf, b1_f32, w2_bf, b2_f32, oc)

    h_out = h_pad[:, :out_f]
    alpha1 = alpha_pair[:, 0:1]
    alpha2 = alpha_pair[:, 1:2]
    return h_out, alpha1, alpha2


gcn2_forward_jit = jax.jit(gcn2_forward)


if __name__ == "__main__":
    N = 128          # nodes
    IN_SIZE = 64
    HID_SIZE = 32
    OUT_SIZE = 16
    NUM_TIME = 8
    NUM_LABEL = 4
    SPLIT = 6

    key = jax.random.PRNGKey(0)
    k_feat, k_adj, k_w1, k_w2, k_lab, k_time = jax.random.split(key, 6)

    # synthetic graph: random symmetric adjacency + self loops, 'both' norm
    a = (jax.random.uniform(k_adj, (N, N)) < 0.05).astype(jnp.float32)
    a = jnp.maximum(a, a.T)
    a = a + jnp.eye(N, dtype=jnp.float32)
    deg = jnp.sum(a, axis=1)
    dinv = 1.0 / jnp.sqrt(deg)
    adj_hat = (dinv[:, None] * a) * dinv[None, :]

    features = jax.random.normal(k_feat, (N, IN_SIZE), dtype=jnp.float32)

    # deterministic parameter init (GraphConv weights + biases)
    w1 = jax.random.normal(k_w1, (IN_SIZE, HID_SIZE), dtype=jnp.float32) * (1.0 / jnp.sqrt(IN_SIZE))
    b1 = jnp.zeros((1, HID_SIZE), dtype=jnp.float32)
    w2 = jax.random.normal(k_w2, (HID_SIZE, OUT_SIZE), dtype=jnp.float32) * (1.0 / jnp.sqrt(HID_SIZE))
    b2 = jnp.zeros((1, OUT_SIZE), dtype=jnp.float32)
    params = (w1, b1, w2, b2)

    labels = jax.random.randint(k_lab, (N,), 0, NUM_LABEL)
    times = jax.random.randint(k_time, (N,), 0, NUM_TIME)
    train = (times < SPLIT).astype(jnp.float32)[:, None]
    test_mask = 1.0 - train
    onehot_tl = jax.nn.one_hot(times * NUM_LABEL + labels, NUM_TIME * NUM_LABEL,
                               dtype=jnp.float32) * train
    onehot_t = jax.nn.one_hot(times, NUM_TIME, dtype=jnp.float32) * train

    h_out, alpha1, alpha2 = gcn2_forward_jit(adj_hat, features, params,
                                             onehot_tl, onehot_t, test_mask)
    jax.block_until_ready((h_out, alpha1, alpha2))
    assert h_out.shape == (N, OUT_SIZE)
    assert alpha1.shape == (NUM_TIME, 1) and alpha2.shape == (NUM_TIME, 1)
    assert bool(jnp.all(jnp.isfinite(h_out)))
    assert bool(jnp.all(jnp.isfinite(alpha1))) and bool(jnp.all(jnp.isfinite(alpha2)))
    print("KERNEL_OK")
</pallas_src>

<mosaic_0001>
module attributes {stable_mosaic.version = 11 : i64} {
  func.func @_gcn2_fused_kernel(%arg0: memref<128x128xbf16, #tpu.memory_space<vmem>>, %arg1: memref<128x64xbf16, #tpu.memory_space<vmem>>, %arg2: memref<64x32xbf16, #tpu.memory_space<vmem>>, %arg3: memref<1x32xf32, #tpu.memory_space<vmem>>, %arg4: memref<32x16xbf16, #tpu.memory_space<vmem>>, %arg5: memref<1x16xf32, #tpu.memory_space<vmem>>, %arg6: memref<128x41xf32, #tpu.memory_space<vmem>>, %arg7: memref<128x128xf32, #tpu.memory_space<vmem>>, %arg8: memref<8x2xf32, #tpu.memory_space<vmem>>) attributes {dimension_semantics = [], scalar_prefetch = 0 : i64, scratch_operands = 0 : i64, tpu.core_type = #tpu.core_type<tc>} {
    %c0 = arith.constant 0 : index
    %c0_0 = arith.constant 0 : index
    %0 = vector.load %arg1[%c0, %c0_0] : memref<128x64xbf16, #tpu.memory_space<vmem>>, vector<128x64xbf16>
    %c0_1 = arith.constant 0 : index
    %c0_2 = arith.constant 0 : index
    %1 = vector.load %arg2[%c0_1, %c0_2] : memref<64x32xbf16, #tpu.memory_space<vmem>>, vector<64x32xbf16>
    %cst = arith.constant dense<0.000000e+00> : vector<128x32xf32>
    %2 = tpu.matmul %0, %1, %cst {dimension_numbers = #tpu.dot_dimension_numbers<[1], [0], [0], [1], [0, 0, 1, 1], [], []>} : vector<128x64xbf16>, vector<64x32xbf16>, vector<128x32xf32> -> vector<128x32xf32>
    %c0_3 = arith.constant 0 : index
    %c0_4 = arith.constant 0 : index
    %3 = vector.load %arg0[%c0_3, %c0_4] : memref<128x128xbf16, #tpu.memory_space<vmem>>, vector<128x128xbf16>
    %4 = arith.truncf %2 : vector<128x32xf32> to vector<128x32xbf16>
    %cst_5 = arith.constant dense<0.000000e+00> : vector<128x32xf32>
    %5 = tpu.matmul %3, %4, %cst_5 {dimension_numbers = #tpu.dot_dimension_numbers<[1], [0], [0], [1], [0, 0, 1, 1], [], []>} : vector<128x128xbf16>, vector<128x32xbf16>, vector<128x32xf32> -> vector<128x32xf32>
    %c0_6 = arith.constant 0 : index
    %c0_7 = arith.constant 0 : index
    %6 = vector.load %arg3[%c0_6, %c0_7] : memref<1x32xf32, #tpu.memory_space<vmem>>, vector<1x32xf32>
    %7 = vector.broadcast %6 : vector<1x32xf32> to vector<128x32xf32>
    %8 = arith.addf %5, %7 : vector<128x32xf32>
    %cst_8 = arith.constant 0.000000e+00 : f32
    %9 = vector.broadcast %cst_8 : f32 to vector<128x32xf32>
    %10 = arith.maximumf %8, %9 : vector<128x32xf32>
    %c0_9 = arith.constant 0 : index
    %c0_10 = arith.constant 0 : index
    %11 = vector.load %arg6[%c0_9, %c0_10] : memref<128x41xf32, #tpu.memory_space<vmem>>, vector<128x41xf32>
    %cst_11 = arith.constant dense<0.000000e+00> : vector<41x32xf32>
    %12 = tpu.matmul %11, %10, %cst_11 {dimension_numbers = #tpu.dot_dimension_numbers<[0], [0], [1], [1], [0, 1, 1, 1], [], []>} : vector<128x41xf32>, vector<128x32xf32>, vector<41x32xf32> -> vector<41x32xf32>
    %13 = vector.extract_strided_slice %12 {offsets = [0, 0], sizes = [32, 32], strides = [1, 1]} : vector<41x32xf32> to vector<32x32xf32>
    %14 = vector.extract_strided_slice %12 {offsets = [32, 0], sizes = [8, 32], strides = [1, 1]} : vector<41x32xf32> to vector<8x32xf32>
    %15 = vector.extract_strided_slice %12 {offsets = [40, 0], sizes = [1, 32], strides = [1, 1]} : vector<41x32xf32> to vector<1x32xf32>
    %cst_12 = arith.constant 0.000000e+00 : f32
    %16 = vector.broadcast %cst_12 : f32 to vector<32x32xf32>
    %17 = tpu.concatenate %13, %16 in 1 : vector<32x32xf32>, vector<32x32xf32> -> vector<32x64xf32>
    %cst_13 = arith.constant 0.000000e+00 : f32
    %18 = vector.broadcast %cst_13 : f32 to vector<8x32xf32>
    %19 = tpu.concatenate %18, %14 in 1 : vector<8x32xf32>, vector<8x32xf32> -> vector<8x64xf32>
    %cst_14 = arith.constant 0.000000e+00 : f32
    %20 = vector.broadcast %cst_14 : f32 to vector<1x64xf32>
    %21 = tpu.concatenate %17, %19, %20 in 0 : vector<32x64xf32>, vector<8x64xf32>, vector<1x64xf32> -> vector<41x64xf32>
    %cst_15 = arith.constant dense<0.000000e+00> : vector<128x64xf32>
    %22 = tpu.matmul %11, %21, %cst_15 {dimension_numbers = #tpu.dot_dimension_numbers<[1], [0], [0], [1], [0, 0, 1, 1], [], []>} : vector<128x41xf32>, vector<41x64xf32>, vector<128x64xf32> -> vector<128x64xf32>
    %23 = vector.extract_strided_slice %22 {offsets = [0, 0], sizes = [128, 32], strides = [1, 1]} : vector<128x64xf32> to vector<128x32xf32>
    %24 = vector.extract_strided_slice %22 {offsets = [0, 32], sizes = [128, 32], strides = [1, 1]} : vector<128x64xf32> to vector<128x32xf32>
    %25 = vector.extract_strided_slice %11 {offsets = [0, 32], sizes = [128, 9], strides = [1, 1]} : vector<128x41xf32> to vector<128x9xf32>
    %26 = arith.subf %10, %23 : vector<128x32xf32>
    %27 = arith.mulf %26, %26 : vector<128x32xf32>
    %28 = arith.subf %23, %24 : vector<128x32xf32>
    %29 = arith.mulf %28, %28 : vector<128x32xf32>
    %30 = vector.broadcast %15 : vector<1x32xf32> to vector<128x32xf32>
    %31 = arith.subf %10, %30 : vector<128x32xf32>
    %32 = arith.mulf %31, %31 : vector<128x32xf32>
    %cst_16 = arith.constant 1.000000e+00 : f32
    %33 = vector.broadcast %cst_16 : f32 to vector<128x1xf32>
    %34 = tpu.concatenate %27, %29, %32, %33 in 1 : vector<128x32xf32>, vector<128x32xf32>, vector<128x32xf32>, vector<128x1xf32> -> vector<128x97xf32>
    %cst_17 = arith.constant dense<0.000000e+00> : vector<9x97xf32>
    %35 = tpu.matmul %25, %34, %cst_17 {dimension_numbers = #tpu.dot_dimension_numbers<[0], [0], [1], [1], [0, 1, 1, 1], [], []>} : vector<128x9xf32>, vector<128x97xf32>, vector<9x97xf32> -> vector<9x97xf32>
    %36 = vector.extract_strided_slice %35 {offsets = [0, 0], sizes = [8, 32], strides = [1, 1]} : vector<9x97xf32> to vector<8x32xf32>
    %cst_18 = arith.constant dense<0.000000e+00> : vector<8xf32>
    %37 = vector.multi_reduction <add>, %36, %cst_18 [1] : vector<8x32xf32> to vector<8xf32>
    %38 = vector.shape_cast %37 : vector<8xf32> to vector<8x1xf32>
    %39 = vector.extract_strided_slice %35 {offsets = [0, 32], sizes = [8, 32], strides = [1, 1]} : vector<9x97xf32> to vector<8x32xf32>
    %cst_19 = arith.constant dense<0.000000e+00> : vector<8xf32>
    %40 = vector.multi_reduction <add>, %39, %cst_19 [1] : vector<8x32xf32> to vector<8xf32>
    %41 = vector.shape_cast %40 : vector<8xf32> to vector<8x1xf32>
    %42 = vector.extract_strided_slice %35 {offsets = [0, 96], sizes = [8, 1], strides = [1, 1]} : vector<9x97xf32> to vector<8x1xf32>
    %43 = vector.extract_strided_slice %35 {offsets = [8, 64], sizes = [1, 32], strides = [1, 1]} : vector<9x97xf32> to vector<1x32xf32>
    %44 = vector.shape_cast %43 : vector<1x32xf32> to vector<1x1x32xf32>
    %cst_20 = arith.constant dense<0.000000e+00> : vector<1xf32>
    %45 = vector.multi_reduction <add>, %44, %cst_20 [1, 2] : vector<1x1x32xf32> to vector<1xf32>
    %46 = vector.shape_cast %45 : vector<1xf32> to vector<1x1x1xf32>
    %47 = vector.extract %46[0, 0, 0] : f32 from vector<1x1x1xf32>
    %48 = vector.extract_strided_slice %35 {offsets = [8, 96], sizes = [1, 1], strides = [1, 1]} : vector<9x97xf32> to vector<1x1xf32>
    %49 = vector.shape_cast %48 : vector<1x1xf32> to vector<1x1x1xf32>
    %cst_21 = arith.constant dense<0.000000e+00> : vector<1xf32>
    %50 = vector.multi_reduction <add>, %49, %cst_21 [1, 2] : vector<1x1x1xf32> to vector<1xf32>
    %51 = vector.shape_cast %50 : vector<1xf32> to vector<1x1x1xf32>
    %52 = vector.extract %51[0, 0, 0] : f32 from vector<1x1x1xf32>
    %cst_22 = arith.constant 1.000000e+00 : f32
    %53 = arith.subf %52, %cst_22 : f32
    %cst_23 = arith.constant 1.000000e+00 : f32
    %54 = arith.maximumf %cst_23, %53 : f32
    %55 = arith.divf %47, %54 : f32
    %cst_24 = arith.constant 1.000000e+00 : f32
    %56 = vector.broadcast %cst_24 : f32 to vector<8x1xf32>
    %57 = arith.subf %42, %56 : vector<8x1xf32>
    %cst_25 = arith.constant 1.000000e+00 : f32
    %58 = vector.broadcast %cst_25 : f32 to vector<8x1xf32>
    %59 = arith.maximumf %58, %57 : vector<8x1xf32>
    %60 = arith.divf %38, %59 : vector<8x1xf32>
    %61 = arith.divf %41, %59 : vector<8x1xf32>
    %62 = vector.broadcast %55 : f32 to vector<8x1xf32>
    %63 = arith.subf %62, %61 : vector<8x1xf32>
    %cst_26 = arith.constant 9.99999997E-7 : f32
    %64 = vector.broadcast %cst_26 : f32 to vector<8x1xf32>
    %65 = arith.maximumf %64, %60 : vector<8x1xf32>
    %66 = arith.divf %63, %65 : vector<8x1xf32>
    %cst_27 = arith.constant 0.000000e+00 : f32
    %67 = vector.broadcast %cst_27 : f32 to vector<8x1xf32>
    %68 = arith.cmpf ogt, %66, %67 : vector<8x1xf32>
    %cst_28 = arith.constant 0.000000e+00 : f32
    %69 = vector.broadcast %cst_28 : f32 to vector<8x1xf32>
    %70 = arith.maximumf %66, %69 : vector<8x1xf32>
    %71 = math.sqrt %70 : vector<8x1xf32>
    %cst_29 = arith.constant 0.000000e+00 : f32
    %72 = vector.broadcast %cst_29 : f32 to vector<8x1xf32>
    %73 = arith.select %68, %71, %72 : vector<8x1xi1>, vector<8x1xf32>
    %74 = arith.truncf %10 : vector<128x32xf32> to vector<128x32xbf16>
    %c0_30 = arith.constant 0 : index
    %c0_31 = arith.constant 0 : index
    %75 = vector.load %arg4[%c0_30, %c0_31] : memref<32x16xbf16, #tpu.memory_space<vmem>>, vector<32x16xbf16>
    %cst_32 = arith.constant dense<0.000000e+00> : vector<128x16xf32>
    %76 = tpu.matmul %74, %75, %cst_32 {dimension_numbers = #tpu.dot_dimension_numbers<[1], [0], [0], [1], [0, 0, 1, 1], [], []>} : vector<128x32xbf16>, vector<32x16xbf16>, vector<128x16xf32> -> vector<128x16xf32>
    %c0_33 = arith.constant 0 : index
    %c0_34 = arith.constant 0 : index
    %77 = vector.load %arg0[%c0_33, %c0_34] : memref<128x128xbf16, #tpu.memory_space<vmem>>, vector<128x128xbf16>
    %78 = arith.truncf %76 : vector<128x16xf32> to vector<128x16xbf16>
    %cst_35 = arith.constant dense<0.000000e+00> : vector<128x16xf32>
    %79 = tpu.matmul %77, %78, %cst_35 {dimension_numbers = #tpu.dot_dimension_numbers<[1], [0], [0], [1], [0, 0, 1, 1], [], []>} : vector<128x128xbf16>, vector<128x16xbf16>, vector<128x16xf32> -> vector<128x16xf32>
    %c0_36 = arith.constant 0 : index
    %c0_37 = arith.constant 0 : index
    %80 = vector.load %arg5[%c0_36, %c0_37] : memref<1x16xf32, #tpu.memory_space<vmem>>, vector<1x16xf32>
    %81 = vector.broadcast %80 : vector<1x16xf32> to vector<128x16xf32>
    %82 = arith.addf %79, %81 : vector<128x16xf32>
    %c0_38 = arith.constant 0 : index
    %c0_39 = arith.constant 0 : index
    %83 = vector.load %arg6[%c0_38, %c0_39] : memref<128x41xf32, #tpu.memory_space<vmem>>, vector<128x41xf32>
    %cst_40 = arith.constant dense<0.000000e+00> : vector<41x16xf32>
    %84 = tpu.matmul %83, %82, %cst_40 {dimension_numbers = #tpu.dot_dimension_numbers<[0], [0], [1], [1], [0, 1, 1, 1], [], []>} : vector<128x41xf32>, vector<128x16xf32>, vector<41x16xf32> -> vector<41x16xf32>
    %85 = vector.extract_strided_slice %84 {offsets = [0, 0], sizes = [32, 16], strides = [1, 1]} : vector<41x16xf32> to vector<32x16xf32>
    %86 = vector.extract_strided_slice %84 {offsets = [32, 0], sizes = [8, 16], strides = [1, 1]} : vector<41x16xf32> to vector<8x16xf32>
    %87 = vector.extract_strided_slice %84 {offsets = [40, 0], sizes = [1, 16], strides = [1, 1]} : vector<41x16xf32> to vector<1x16xf32>
    %cst_41 = arith.constant 0.000000e+00 : f32
    %88 = vector.broadcast %cst_41 : f32 to vector<32x16xf32>
    %89 = tpu.concatenate %85, %88 in 1 : vector<32x16xf32>, vector<32x16xf32> -> vector<32x32xf32>
    %cst_42 = arith.constant 0.000000e+00 : f32
    %90 = vector.broadcast %cst_42 : f32 to vector<8x16xf32>
    %91 = tpu.concatenate %90, %86 in 1 : vector<8x16xf32>, vector<8x16xf32> -> vector<8x32xf32>
    %cst_43 = arith.constant 0.000000e+00 : f32
    %92 = vector.broadcast %cst_43 : f32 to vector<1x32xf32>
    %93 = tpu.concatenate %89, %91, %92 in 0 : vector<32x32xf32>, vector<8x32xf32>, vector<1x32xf32> -> vector<41x32xf32>
    %cst_44 = arith.constant dense<0.000000e+00> : vector<128x32xf32>
    %94 = tpu.matmul %83, %93, %cst_44 {dimension_numbers = #tpu.dot_dimension_numbers<[1], [0], [0], [1], [0, 0, 1, 1], [], []>} : vector<128x41xf32>, vector<41x32xf32>, vector<128x32xf32> -> vector<128x32xf32>
    %95 = vector.extract_strided_slice %94 {offsets = [0, 0], sizes = [128, 16], strides = [1, 1]} : vector<128x32xf32> to vector<128x16xf32>
    %96 = vector.extract_strided_slice %94 {offsets = [0, 16], sizes = [128, 16], strides = [1, 1]} : vector<128x32xf32> to vector<128x16xf32>
    %97 = vector.extract_strided_slice %83 {offsets = [0, 32], sizes = [128, 9], strides = [1, 1]} : vector<128x41xf32> to vector<128x9xf32>
    %98 = arith.subf %82, %95 : vector<128x16xf32>
    %99 = arith.mulf %98, %98 : vector<128x16xf32>
    %100 = arith.subf %95, %96 : vector<128x16xf32>
    %101 = arith.mulf %100, %100 : vector<128x16xf32>
    %102 = vector.broadcast %87 : vector<1x16xf32> to vector<128x16xf32>
    %103 = arith.subf %82, %102 : vector<128x16xf32>
    %104 = arith.mulf %103, %103 : vector<128x16xf32>
    %cst_45 = arith.constant 1.000000e+00 : f32
    %105 = vector.broadcast %cst_45 : f32 to vector<128x1xf32>
    %106 = tpu.concatenate %99, %101, %104, %105 in 1 : vector<128x16xf32>, vector<128x16xf32>, vector<128x16xf32>, vector<128x1xf32> -> vector<128x49xf32>
    %cst_46 = arith.constant dense<0.000000e+00> : vector<9x49xf32>
    %107 = tpu.matmul %97, %106, %cst_46 {dimension_numbers = #tpu.dot_dimension_numbers<[0], [0], [1], [1], [0, 1, 1, 1], [], []>} : vector<128x9xf32>, vector<128x49xf32>, vector<9x49xf32> -> vector<9x49xf32>
    %108 = vector.extract_strided_slice %107 {offsets = [0, 0], sizes = [8, 16], strides = [1, 1]} : vector<9x49xf32> to vector<8x16xf32>
    %cst_47 = arith.constant dense<0.000000e+00> : vector<8xf32>
    %109 = vector.multi_reduction <add>, %108, %cst_47 [1] : vector<8x16xf32> to vector<8xf32>
    %110 = vector.shape_cast %109 : vector<8xf32> to vector<8x1xf32>
    %111 = vector.extract_strided_slice %107 {offsets = [0, 16], sizes = [8, 16], strides = [1, 1]} : vector<9x49xf32> to vector<8x16xf32>
    %cst_48 = arith.constant dense<0.000000e+00> : vector<8xf32>
    %112 = vector.multi_reduction <add>, %111, %cst_48 [1] : vector<8x16xf32> to vector<8xf32>
    %113 = vector.shape_cast %112 : vector<8xf32> to vector<8x1xf32>
    %114 = vector.extract_strided_slice %107 {offsets = [0, 48], sizes = [8, 1], strides = [1, 1]} : vector<9x49xf32> to vector<8x1xf32>
    %115 = vector.extract_strided_slice %107 {offsets = [8, 32], sizes = [1, 16], strides = [1, 1]} : vector<9x49xf32> to vector<1x16xf32>
    %116 = vector.shape_cast %115 : vector<1x16xf32> to vector<1x1x16xf32>
    %cst_49 = arith.constant dense<0.000000e+00> : vector<1xf32>
    %117 = vector.multi_reduction <add>, %116, %cst_49 [1, 2] : vector<1x1x16xf32> to vector<1xf32>
    %118 = vector.shape_cast %117 : vector<1xf32> to vector<1x1x1xf32>
    %119 = vector.extract %118[0, 0, 0] : f32 from vector<1x1x1xf32>
    %120 = vector.extract_strided_slice %107 {offsets = [8, 48], sizes = [1, 1], strides = [1, 1]} : vector<9x49xf32> to vector<1x1xf32>
    %121 = vector.shape_cast %120 : vector<1x1xf32> to vector<1x1x1xf32>
    %cst_50 = arith.constant dense<0.000000e+00> : vector<1xf32>
    %122 = vector.multi_reduction <add>, %121, %cst_50 [1, 2] : vector<1x1x1xf32> to vector<1xf32>
    %123 = vector.shape_cast %122 : vector<1xf32> to vector<1x1x1xf32>
    %124 = vector.extract %123[0, 0, 0] : f32 from vector<1x1x1xf32>
    %cst_51 = arith.constant 1.000000e+00 : f32
    %125 = arith.subf %124, %cst_51 : f32
    %cst_52 = arith.constant 1.000000e+00 : f32
    %126 = arith.maximumf %cst_52, %125 : f32
    %127 = arith.divf %119, %126 : f32
    %cst_53 = arith.constant 1.000000e+00 : f32
    %128 = vector.broadcast %cst_53 : f32 to vector<8x1xf32>
    %129 = arith.subf %114, %128 : vector<8x1xf32>
    %cst_54 = arith.constant 1.000000e+00 : f32
    %130 = vector.broadcast %cst_54 : f32 to vector<8x1xf32>
    %131 = arith.maximumf %130, %129 : vector<8x1xf32>
    %132 = arith.divf %110, %131 : vector<8x1xf32>
    %133 = arith.divf %113, %131 : vector<8x1xf32>
    %134 = vector.broadcast %127 : f32 to vector<8x1xf32>
    %135 = arith.subf %134, %133 : vector<8x1xf32>
    %cst_55 = arith.constant 9.99999997E-7 : f32
    %136 = vector.broadcast %cst_55 : f32 to vector<8x1xf32>
    %137 = arith.maximumf %136, %132 : vector<8x1xf32>
    %138 = arith.divf %135, %137 : vector<8x1xf32>
    %cst_56 = arith.constant 0.000000e+00 : f32
    %139 = vector.broadcast %cst_56 : f32 to vector<8x1xf32>
    %140 = arith.cmpf ogt, %138, %139 : vector<8x1xf32>
    %cst_57 = arith.constant 0.000000e+00 : f32
    %141 = vector.broadcast %cst_57 : f32 to vector<8x1xf32>
    %142 = arith.maximumf %138, %141 : vector<8x1xf32>
    %143 = math.sqrt %142 : vector<8x1xf32>
    %cst_58 = arith.constant 0.000000e+00 : f32
    %144 = vector.broadcast %cst_58 : f32 to vector<8x1xf32>
    %145 = arith.select %140, %143, %144 : vector<8x1xi1>, vector<8x1xf32>
    %cst_59 = arith.constant 0.000000e+00 : f32
    %146 = vector.broadcast %cst_59 : f32 to vector<128x112xf32>
    %147 = tpu.concatenate %82, %146 in 1 : vector<128x16xf32>, vector<128x112xf32> -> vector<128x128xf32>
    %c0_60 = arith.constant 0 : index
    %c0_61 = arith.constant 0 : index
    %148 = vector.load %arg7[%c0_60, %c0_61] : memref<128x128xf32, #tpu.memory_space<vmem>>, vector<128x128xf32>
    tpu.vector_store %arg7[%c0_60, %c0_61], %147 {strides = array<i32>} : memref<128x128xf32, #tpu.memory_space<vmem>>, vector<128x128xf32>,
    %149 = tpu.concatenate %73, %145 in 1 : vector<8x1xf32>, vector<8x1xf32> -> vector<8x2xf32>
    %c0_62 = arith.constant 0 : index
    %c0_63 = arith.constant 0 : index
    %150 = vector.load %arg8[%c0_62, %c0_63] : memref<8x2xf32, #tpu.memory_space<vmem>>, vector<8x2xf32>
    tpu.vector_store %arg8[%c0_62, %c0_63], %149 {strides = array<i32>} : memref<8x2xf32, #tpu.memory_space<vmem>>, vector<8x2xf32>,
    return
  }
}

</mosaic_0001>

<llo_original>
// kernel: gcn2_forward.1
$region0: #{gcn2_forward.1}
  #allocation0 [shape = 'u32[]', space=smem, size = 0x4, offset = 0x4, fixed_abs, tag = 'smem constant byte address 0x4 - core index']
  #allocation1 [shape = 'u32[144,128]{1,0:T(1,128)}', space=vmem, size = 0x12000, scoped, tag = 'internal scratch']
  %s0 = inlined_call_operand.vmem [shape: bf16[128,128], index: 0, kind: input, shape index: {}]
  %s1 = inlined_call_operand.vmem [shape: bf16[128,64], index: 1, kind: input, shape index: {}]
  %s2 = inlined_call_operand.vmem [shape: bf16[64,32], index: 2, kind: input, shape index: {}]
  %s3 = inlined_call_operand.vmem [shape: f32[1,32], index: 3, kind: input, shape index: {}]
  %s4 = inlined_call_operand.vmem [shape: bf16[32,16], index: 4, kind: input, shape index: {}]
  %s5 = inlined_call_operand.vmem [shape: f32[1,16], index: 5, kind: input, shape index: {}]
  %s6 = inlined_call_operand.vmem [shape: f32[128,41], index: 6, kind: input, shape index: {}]
  %s7 = inlined_call_operand.vmem [shape: f32[128,128], index: 7, kind: output, shape index: {0}]
  %s8 = inlined_call_operand.vmem [shape: f32[8,2], index: 8, kind: output, shape index: {1}]
  %9 = xla_tuple %s7, %s8
  %s10 = sld [smem:[#allocation0]]
  $region46: #{gcn2_forward.1} parent=0
    _
  %s12 = ssub.s32 1, %s10
  %s13 = scalar_select 0, %s12, %s10
  // Predicated region
  $region2: #{gcn2_forward.1} parent=0 // pred_check
    _
  $region3: #{gcn2_forward.1} parent=0 // pred_check_branch
    %15 = sbr.rel (0) target = $region5
  $region4: #{gcn2_forward.1} parent=0 // pred_region
    _
  $region5: #{gcn2_forward.1} parent=0 // pred_fallthru
    _
  // Predicated region
  $region6: #{gcn2_forward.1} parent=0 // pred_check
    _
  $region7: #{gcn2_forward.1} parent=0 // pred_check_branch
    %17 = sbr.rel (0) target = $region9
  $region8: #{gcn2_forward.1} parent=0 // pred_region
    _
  $region9: #{gcn2_forward.1} parent=0 // pred_fallthru
    _
  // Predicated region
  $region10: #{gcn2_forward.1} parent=0 // pred_check
    _
  $region11: #{gcn2_forward.1} parent=0 // pred_check_branch
    %19 = sbr.rel (0) target = $region13
  $region12: #{gcn2_forward.1} parent=0 // pred_region
    _
  $region13: #{gcn2_forward.1} parent=0 // pred_fallthru
    _
  // Predicated region
  $region14: #{gcn2_forward.1} parent=0 // pred_check
    _
  $region15: #{gcn2_forward.1} parent=0 // pred_check_branch
    %21 = sbr.rel (0) target = $region17
  $region16: #{gcn2_forward.1} parent=0 // pred_region
    _
  $region17: #{gcn2_forward.1} parent=0 // pred_fallthru
    _
  // Predicated region
  $region18: #{gcn2_forward.1} parent=0 // pred_check
    _
  $region19: #{gcn2_forward.1} parent=0 // pred_check_branch
    %23 = sbr.rel (0) target = $region21
  $region20: #{gcn2_forward.1} parent=0 // pred_region
    _
  $region21: #{gcn2_forward.1} parent=0 // pred_fallthru
    _
  // Predicated region
  $region22: #{gcn2_forward.1} parent=0 // pred_check
    _
  $region23: #{gcn2_forward.1} parent=0 // pred_check_branch
    %25 = sbr.rel (0) target = $region25
  $region24: #{gcn2_forward.1} parent=0 // pred_region
    _
  $region25: #{gcn2_forward.1} parent=0 // pred_fallthru
    _
  // Predicated region
  $region26: #{gcn2_forward.1} parent=0 // pred_check
    _
  $region27: #{gcn2_forward.1} parent=0 // pred_check_branch
    %27 = sbr.rel (0) target = $region29
  $region28: #{gcn2_forward.1} parent=0 // pred_region
    _
  $region29: #{gcn2_forward.1} parent=0 // pred_fallthru
    _
  %v29 = vld [vmem:[%s1] sm:$0xf]
  %v30 = vld [vmem:[%s1 + $0x4] sm:$0xf]
  %v31 = vld [vmem:[%s1 + $0x8] sm:$0xf]
  %v32 = vld [vmem:[%s1 + $0xc] sm:$0xf]
  %v33 = vld [vmem:[%s1 + $0x10] sm:$0xf]
  %v34 = vld [vmem:[%s1 + $0x14] sm:$0xf]
  %v35 = vld [vmem:[%s1 + $0x18] sm:$0xf]
  %v36 = vld [vmem:[%s1 + $0x1c] sm:$0xf]
  %v37 = vld [vmem:[%s1 + $0x20] sm:$0xf]
  %v38 = vld [vmem:[%s1 + $0x24] sm:$0xf]
  %v39 = vld [vmem:[%s1 + $0x28] sm:$0xf]
  %v40 = vld [vmem:[%s1 + $0x2c] sm:$0xf]
  %v41 = vld [vmem:[%s1 + $0x30] sm:$0xf]
  %v42 = vld [vmem:[%s1 + $0x34] sm:$0xf]
  %v43 = vld [vmem:[%s1 + $0x38] sm:$0xf]
  %v44 = vld [vmem:[%s1 + $0x3c] sm:$0xf]
  %v45 = vld [vmem:[%s2] sm:$0xf]
  %v46 = vld [vmem:[%s2 + $0x4] sm:$0xf]
  %v47 = vld [vmem:[%s2 + $0x8] sm:$0xf]
  %v48 = vld [vmem:[%s2 + $0xc] sm:$0xf]
  %v49 = vld [vmem:[%s2 + $0x10] sm:$0xf]
  %v50 = vld [vmem:[%s2 + $0x14] sm:$0xf]
  %v51 = vld [vmem:[%s2 + $0x18] sm:$0xf]
  %v52 = vld [vmem:[%s2 + $0x1c] sm:$0xf]
  %v69 = vunpack.c.l.b16 %v29
  %v70 = vunpack.c.l.b16 %v30
  %v71 = vunpack.c.l.b16 %v31
  %v72 = vunpack.c.l.b16 %v32
  %v73 = vunpack.c.l.b16 %v33
  %v74 = vunpack.c.l.b16 %v34
  %v75 = vunpack.c.l.b16 %v35
  %v76 = vunpack.c.l.b16 %v36
  %v77 = vunpack.c.l.b16 %v37
  %v78 = vunpack.c.l.b16 %v38
  %v79 = vunpack.c.l.b16 %v39
  %v80 = vunpack.c.l.b16 %v40
  %v81 = vunpack.c.l.b16 %v41
  %v82 = vunpack.c.l.b16 %v42
  %v83 = vunpack.c.l.b16 %v43
  %v84 = vunpack.c.l.b16 %v44
  %v85 = vpack.c.b16 %v70, %v69
  %v86 = vpack.c.b16 %v72, %v71
  %v87 = vpack.c.b16 %v74, %v73
  %v88 = vpack.c.b16 %v76, %v75
  %v89 = vpack.c.b16 %v78, %v77
  %v90 = vpack.c.b16 %v80, %v79
  %v91 = vpack.c.b16 %v82, %v81
  %v92 = vpack.c.b16 %v84, %v83
  %v101 = vunpack.c.l.b16 %v45
  %v102 = vunpack.c.l.b16 %v46
  %v103 = vunpack.c.l.b16 %v47
  %v104 = vunpack.c.l.b16 %v48
  %v105 = vunpack.c.l.b16 %v49
  %v106 = vunpack.c.l.b16 %v50
  %v107 = vunpack.c.l.b16 %v51
  %v108 = vunpack.c.l.b16 %v52
  %v109 = vpack.c.b16 %v102, %v101
  %v110 = vpack.c.b16 %v104, %v103
  %v111 = vpack.c.b16 %v106, %v105
  %v112 = vpack.c.b16 %v108, %v107
  %vm117 = vcmask 523264
  %v119 = vsel %vm117, %v85, 0
  %v122 = vsel %vm117, %v86, 0
  %v125 = vsel %vm117, %v87, 0
  %v128 = vsel %vm117, %v88, 0
  %v131 = vsel %vm117, %v89, 0
  %v134 = vsel %vm117, %v90, 0
  %v137 = vsel %vm117, %v91, 0
  %v140 = vsel %vm117, %v92, 0
  %142 = vmatprep.subr.bf16.mxu0 0
  %143 = vmatpush1.bf16.msra.mxu0 %v109
  %144 = vmatprep.subr.bf16.mxu0 0
  %145 = vmatpush1.bf16.msra.mxu0 %v110
  %146 = vmatprep.subr.bf16.mxu0 0
  %147 = vmatpush1.bf16.msra.mxu0 %v111
  %148 = vmatprep.subr.bf16.mxu0 0
  %149 = vmatpush1.bf16.msra.mxu0 %v112
  %150 = vmatprep.subr.bf16.mxu0 0
  %151 = vmatpush1.bf16.msra.mxu0 0
  %152 = vmatprep.subr.bf16.mxu0 0
  %153 = vmatpush1.bf16.msra.mxu0 0
  %154 = vmatprep.subr.bf16.mxu0 0
  %155 = vmatpush1.bf16.msra.mxu0 0
  %156 = vmatprep.subr.bf16.mxu0 0
  %157 = vmatpush1.bf16.msra.mxu0 0
  %158 = vmatprep.subr.bf16.mxu0 0
  %159 = vmatpush1.bf16.msra.mxu0 0
  %160 = vmatprep.subr.bf16.mxu0 0
  %161 = vmatpush1.bf16.msra.mxu0 0
  %162 = vmatprep.subr.bf16.mxu0 0
  %163 = vmatpush1.bf16.msra.mxu0 0
  %164 = vmatprep.subr.bf16.mxu0 0
  %165 = vmatpush1.bf16.msra.mxu0 0
  %166 = vmatprep.subr.bf16.mxu0 0
  %167 = vmatpush1.bf16.msra.mxu0 0
  %168 = vmatprep.subr.bf16.mxu0 0
  %169 = vmatpush1.bf16.msra.mxu0 0
  %170 = vmatprep.subr.bf16.mxu0 0
  %171 = vmatpush1.bf16.msra.mxu0 0
  %172 = vmatprep.subr.bf16.mxu0 0
  %173 = vmatpush1.bf16.msra.mxu0 0
  %174 = vmatprep.mubr.bf16.mxu0 0
  %175 = vmatmul.mubr.bf16.gmra.mrb[0].mxu0 %v119
  %v176 = vpop.f32.mrb[0].mxu0
  %v177 = vadd.f32 0.0, %v176
  %v178 = vpop.f32.mrb[0].mxu0
  %v179 = vpop.f32.mrb[0].mxu0
  %v180 = vadd.f32 0.0, %v179
  %v181 = vpop.f32.mrb[0].mxu0
  %182 = vmatprep.mubr.bf16.mxu0 0
  %183 = vmatmul.mubr.bf16.gmra.mrb[0].mxu0 %v122
  %v184 = vpop.f32.mrb[0].mxu0
  %v185 = vadd.f32 0.0, %v184
  %v186 = vpop.f32.mrb[0].mxu0
  %v187 = vpop.f32.mrb[0].mxu0
  %v188 = vadd.f32 0.0, %v187
  %v189 = vpop.f32.mrb[0].mxu0
  %190 = vmatprep.mubr.bf16.mxu0 0
  %191 = vmatmul.mubr.bf16.gmra.mrb[0].mxu0 %v125
  %v192 = vpop.f32.mrb[0].mxu0
  %v193 = vadd.f32 0.0, %v192
  %v194 = vpop.f32.mrb[0].mxu0
  %v195 = vpop.f32.mrb[0].mxu0
  %v196 = vadd.f32 0.0, %v195
  %v197 = vpop.f32.mrb[0].mxu0
  %198 = vmatprep.mubr.bf16.mxu0 0
  %199 = vmatmul.mubr.bf16.gmra.mrb[0].mxu0 %v128
  %v200 = vpop.f32.mrb[0].mxu0
  %v201 = vadd.f32 0.0, %v200
  %v202 = vpop.f32.mrb[0].mxu0
  %v203 = vpop.f32.mrb[0].mxu0
  %v204 = vadd.f32 0.0, %v203
  %v205 = vpop.f32.mrb[0].mxu0
  %206 = vmatprep.mubr.bf16.mxu0 0
  %207 = vmatmul.mubr.bf16.gmra.mrb[0].mxu0 %v131
  %v208 = vpop.f32.mrb[0].mxu0
  %v209 = vadd.f32 0.0, %v208
  %v210 = vpop.f32.mrb[0].mxu0
  %v211 = vpop.f32.mrb[0].mxu0
  %v212 = vadd.f32 0.0, %v211
  %v213 = vpop.f32.mrb[0].mxu0
  %214 = vmatprep.mubr.bf16.mxu0 0
  %215 = vmatmul.mubr.bf16.gmra.mrb[0].mxu0 %v134
  %v216 = vpop.f32.mrb[0].mxu0
  %v217 = vadd.f32 0.0, %v216
  %v218 = vpop.f32.mrb[0].mxu0
  %v219 = vpop.f32.mrb[0].mxu0
  %v220 = vadd.f32 0.0, %v219
  %v221 = vpop.f32.mrb[0].mxu0
  %222 = vmatprep.mubr.bf16.mxu0 0
  %223 = vmatmul.mubr.bf16.gmra.mrb[0].mxu0 %v137
  %v224 = vpop.f32.mrb[0].mxu0
  %v225 = vadd.f32 0.0, %v224
  %v226 = vpop.f32.mrb[0].mxu0
  %v227 = vpop.f32.mrb[0].mxu0
  %v228 = vadd.f32 0.0, %v227
  %v229 = vpop.f32.mrb[0].mxu0
  %230 = vmatprep.mubr.bf16.mxu0 0
  %231 = vmatmul.mubr.bf16.gmra.mrb[0].mxu0 %v140
  %v232 = vpop.f32.mrb[0].mxu0
  %v233 = vadd.f32 0.0, %v232
  %v234 = vpop.f32.mrb[0].mxu0
  %v235 = vpop.f32.mrb[0].mxu0
  %v236 = vadd.f32 0.0, %v235
  %v237 = vpop.f32.mrb[0].mxu0
  %238 = vdwg.mxu0
  %v239 = vld [vmem:[%s0] sm:$0xf]
  %v240 = vld [vmem:[%s0 + $0x4] sm:$0xf]
  %v241 = vld [vmem:[%s0 + $0x8] sm:$0xf]
  %v242 = vld [vmem:[%s0 + $0xc] sm:$0xf]
  %v243 = vld [vmem:[%s0 + $0x10] sm:$0xf]
  %v244 = vld [vmem:[%s0 + $0x14] sm:$0xf]
  %v245 = vld [vmem:[%s0 + $0x18] sm:$0xf]
  %v246 = vld [vmem:[%s0 + $0x1c] sm:$0xf]
  %v247 = vld [vmem:[%s0 + $0x20] sm:$0xf]
  %v248 = vld [vmem:[%s0 + $0x24] sm:$0xf]
  %v249 = vld [vmem:[%s0 + $0x28] sm:$0xf]
  %v250 = vld [vmem:[%s0 + $0x2c] sm:$0xf]
  %v251 = vld [vmem:[%s0 + $0x30] sm:$0xf]
  %v252 = vld [vmem:[%s0 + $0x34] sm:$0xf]
  %v253 = vld [vmem:[%s0 + $0x38] sm:$0xf]
  %v254 = vld [vmem:[%s0 + $0x3c] sm:$0xf]
  %v255 = vpack.c.bf16 %v180, %v177
  %v256 = vpack.c.bf16 %v188, %v185
  %v257 = vpack.c.bf16 %v196, %v193
  %v258 = vpack.c.bf16 %v204, %v201
  %v259 = vpack.c.bf16 %v212, %v209
  %v260 = vpack.c.bf16 %v220, %v217
  %v261 = vpack.c.bf16 %v228, %v225
  %v262 = vpack.c.bf16 %v236, %v233
  %v263 = vld [vmem:[%s3] sm:$0x1]
  %v265 = vlaneseq
  %v266 = vshrl.u32 %v265, 7
  %v267 = vsub.s32 0, %v266
  %v268 = vrot.slane %v263, %v267
  %v286 = vunpack.c.l.b16 %v239
  %v287 = vunpack.c.l.b16 %v240
  %v288 = vunpack.c.l.b16 %v241
  %v289 = vunpack.c.l.b16 %v242
  %v290 = vunpack.c.l.b16 %v243
  %v291 = vunpack.c.l.b16 %v244
  %v292 = vunpack.c.l.b16 %v245
  %v293 = vunpack.c.l.b16 %v246
  %v294 = vunpack.c.l.b16 %v247
  %v295 = vunpack.c.l.b16 %v248
  %v296 = vunpack.c.l.b16 %v249
  %v297 = vunpack.c.l.b16 %v250
  %v298 = vunpack.c.l.b16 %v251
  %v299 = vunpack.c.l.b16 %v252
  %v300 = vunpack.c.l.b16 %v253
  %v301 = vunpack.c.l.b16 %v254
  %v302 = vpack.c.b16 %v287, %v286
  %v303 = vpack.c.b16 %v289, %v288
  %v304 = vpack.c.b16 %v291, %v290
  %v305 = vpack.c.b16 %v293, %v292
  %v306 = vpack.c.b16 %v295, %v294
  %v307 = vpack.c.b16 %v297, %v296
  %v308 = vpack.c.b16 %v299, %v298
  %v309 = vpack.c.b16 %v301, %v300
  %318 = vmatprep.subr.bf16.mxu0 0
  %319 = vmatpush1.bf16.msra.mxu0 %v255
  %320 = vmatprep.subr.bf16.mxu0 0
  %321 = vmatpush1.bf16.msra.mxu0 %v256
  %322 = vmatprep.subr.bf16.mxu0 0
  %323 = vmatpush1.bf16.msra.mxu0 %v257
  %324 = vmatprep.subr.bf16.mxu0 0
  %325 = vmatpush1.bf16.msra.mxu0 %v258
  %326 = vmatprep.subr.bf16.mxu0 0
  %327 = vmatpush1.bf16.msra.mxu0 %v259
  %328 = vmatprep.subr.bf16.mxu0 0
  %329 = vmatpush1.bf16.msra.mxu0 %v260
  %330 = vmatprep.subr.bf16.mxu0 0
  %331 = vmatpush1.bf16.msra.mxu0 %v261
  %332 = vmatprep.subr.bf16.mxu0 0
  %333 = vmatpush1.bf16.msra.mxu0 %v262
  %334 = vmatprep.subr.bf16.mxu0 0
  %335 = vmatpush1.bf16.msra.mxu0 0
  %336 = vmatprep.subr.bf16.mxu0 0
  %337 = vmatpush1.bf16.msra.mxu0 0
  %338 = vmatprep.subr.bf16.mxu0 0
  %339 = vmatpush1.bf16.msra.mxu0 0
  %340 = vmatprep.subr.bf16.mxu0 0
  %341 = vmatpush1.bf16.msra.mxu0 0
  %342 = vmatprep.subr.bf16.mxu0 0
  %343 = vmatpush1.bf16.msra.mxu0 0
  %344 = vmatprep.subr.bf16.mxu0 0
  %345 = vmatpush1.bf16.msra.mxu0 0
  %346 = vmatprep.subr.bf16.mxu0 0
  %347 = vmatpush1.bf16.msra.mxu0 0
  %348 = vmatprep.subr.bf16.mxu0 0
  %349 = vmatpush1.bf16.msra.mxu0 0
  %350 = vmatprep.mubr.bf16.mxu0 0
  %351 = vmatmul.mubr.bf16.gmra.mrb[0].mxu0 %v302
  %v352 = vpop.f32.mrb[0].mxu0
  %v353 = vadd.f32 %v268, %v352
  %v354 = vpop.f32.mrb[0].mxu0
  %v355 = vpop.f32.mrb[0].mxu0
  %v356 = vadd.f32 %v268, %v355
  %v357 = vpop.f32.mrb[0].mxu0
  %358 = vmatprep.mubr.bf16.mxu0 0
  %359 = vmatmul.mubr.bf16.gmra.mrb[0].mxu0 %v303
  %v360 = vpop.f32.mrb[0].mxu0
  %v361 = vadd.f32 %v268, %v360
  %v362 = vpop.f32.mrb[0].mxu0
  %v363 = vpop.f32.mrb[0].mxu0
  %v364 = vadd.f32 %v268, %v363
  %v365 = vpop.f32.mrb[0].mxu0
  %366 = vmatprep.mubr.bf16.mxu0 0
  %367 = vmatmul.mubr.bf16.gmra.mrb[0].mxu0 %v304
  %v368 = vpop.f32.mrb[0].mxu0
  %v369 = vadd.f32 %v268, %v368
  %v370 = vpop.f32.mrb[0].mxu0
  %v371 = vpop.f32.mrb[0].mxu0
  %v372 = vadd.f32 %v268, %v371
  %v373 = vpop.f32.mrb[0].mxu0
  %374 = vmatprep.mubr.bf16.mxu0 0
  %375 = vmatmul.mubr.bf16.gmra.mrb[0].mxu0 %v305
  %v376 = vpop.f32.mrb[0].mxu0
  %v377 = vadd.f32 %v268, %v376
  %v378 = vpop.f32.mrb[0].mxu0
  %v379 = vpop.f32.mrb[0].mxu0
  %v380 = vadd.f32 %v268, %v379
  %v381 = vpop.f32.mrb[0].mxu0
  %382 = vmatprep.mubr.bf16.mxu0 0
  %383 = vmatmul.mubr.bf16.gmra.mrb[0].mxu0 %v306
  %v384 = vpop.f32.mrb[0].mxu0
  %v385 = vadd.f32 %v268, %v384
  %v386 = vpop.f32.mrb[0].mxu0
  %v387 = vpop.f32.mrb[0].mxu0
  %v388 = vadd.f32 %v268, %v387
  %v389 = vpop.f32.mrb[0].mxu0
  %390 = vmatprep.mubr.bf16.mxu0 0
  %391 = vmatmul.mubr.bf16.gmra.mrb[0].mxu0 %v307
  %v392 = vpop.f32.mrb[0].mxu0
  %v393 = vadd.f32 %v268, %v392
  %v394 = vpop.f32.mrb[0].mxu0
  %v395 = vpop.f32.mrb[0].mxu0
  %v396 = vadd.f32 %v268, %v395
  %v397 = vpop.f32.mrb[0].mxu0
  %398 = vmatprep.mubr.bf16.mxu0 0
  %399 = vmatmul.mubr.bf16.gmra.mrb[0].mxu0 %v308
  %v400 = vpop.f32.mrb[0].mxu0
  %v401 = vadd.f32 %v268, %v400
  %v402 = vpop.f32.mrb[0].mxu0
  %v403 = vpop.f32.mrb[0].mxu0
  %v404 = vadd.f32 %v268, %v403
  %v405 = vpop.f32.mrb[0].mxu0
  %406 = vmatprep.mubr.bf16.mxu0 0
  %407 = vmatmul.mubr.bf16.gmra.mrb[0].mxu0 %v309
  %v408 = vpop.f32.mrb[0].mxu0
  %v409 = vadd.f32 %v268, %v408
  %v410 = vpop.f32.mrb[0].mxu0
  %v411 = vpop.f32.mrb[0].mxu0
  %v412 = vadd.f32 %v268, %v411
  %v413 = vpop.f32.mrb[0].mxu0
  %414 = vdwg.mxu0
  %v415 = vmax.f32 %v353, 0.0
  %v416 = vmax.f32 %v356, 0.0
  %v417 = vmax.f32 %v361, 0.0
  %v418 = vmax.f32 %v364, 0.0
  %v419 = vmax.f32 %v369, 0.0
  %v420 = vmax.f32 %v372, 0.0
  %v421 = vmax.f32 %v377, 0.0
  %v422 = vmax.f32 %v380, 0.0
  %v423 = vmax.f32 %v385, 0.0
  %v424 = vmax.f32 %v388, 0.0
  %v425 = vmax.f32 %v393, 0.0
  %v426 = vmax.f32 %v396, 0.0
  %v427 = vmax.f32 %v401, 0.0
  %v428 = vmax.f32 %v404, 0.0
  %v429 = vmax.f32 %v409, 0.0
  %v430 = vmax.f32 %v412, 0.0
  %v431 = vld [vmem:[%s6] sm:$0xff]
  %v432 = vld [vmem:[%s6 + $0x8] sm:$0xff]
  %v433 = vld [vmem:[%s6 + $0x10] sm:$0xff]
  %v434 = vld [vmem:[%s6 + $0x18] sm:$0xff]
  %v435 = vld [vmem:[%s6 + $0x20] sm:$0xff]
  %v436 = vld [vmem:[%s6 + $0x28] sm:$0xff]
  %v437 = vld [vmem:[%s6 + $0x30] sm:$0xff]
  %v438 = vld [vmem:[%s6 + $0x38] sm:$0xff]
  %v439 = vld [vmem:[%s6 + $0x40] sm:$0xff]
  %v440 = vld [vmem:[%s6 + $0x48] sm:$0xff]
  %v441 = vld [vmem:[%s6 + $0x50] sm:$0xff]
  %v442 = vld [vmem:[%s6 + $0x58] sm:$0xff]
  %v443 = vld [vmem:[%s6 + $0x60] sm:$0xff]
  %v444 = vld [vmem:[%s6 + $0x68] sm:$0xff]
  %v445 = vld [vmem:[%s6 + $0x70] sm:$0xff]
  %v446 = vld [vmem:[%s6 + $0x78] sm:$0xff]
  %447 = vxpose.xlu0.b32.start [1/16] %v431, 128
  %448 = vxpose.xlu0.b32.cont [2/16] %v432, 128
  %449 = vxpose.xlu0.b32.cont [3/16] %v433, 128
  %450 = vxpose.xlu0.b32.cont [4/16] %v434, 128
  %451 = vxpose.xlu0.b32.cont [5/16] %v435, 128
  %452 = vxpose.xlu0.b32.cont [6/16] %v436, 128
  %453 = vxpose.xlu0.b32.cont [7/16] %v437, 128
  %454 = vxpose.xlu0.b32.cont [8/16] %v438, 128
  %455 = vxpose.xlu0.b32.cont [9/16] %v439, 128
  %456 = vxpose.xlu0.b32.cont [10/16] %v440, 128
  %457 = vxpose.xlu0.b32.cont [11/16] %v441, 128
  %458 = vxpose.xlu0.b32.cont [12/16] %v442, 128
  %459 = vxpose.xlu0.b32.cont [13/16] %v443, 128
  %460 = vxpose.xlu0.b32.cont [14/16] %v444, 128
  %461 = vxpose.xlu0.b32.cont [15/16] %v445, 128
  %462 = vxpose.xlu0.b32.end [16/16] %v446, 128
  %v463 = vpop.trf.xlu0
  %v464 = vpop.trf.xlu0
  %v465 = vpop.trf.xlu0
  %v466 = vpop.trf.xlu0
  %v467 = vpop.trf.xlu0
  %v468 = vpop.trf.xlu0
  %v469 = vpop.trf.xlu0
  %v470 = vpop.trf.xlu0
  %v471 = vpop.trf.xlu0
  %v472 = vpop.trf.xlu0
  %v473 = vpop.trf.xlu0
  %v474 = vpop.trf.xlu0
  %v475 = vpop.trf.xlu0
  %v476 = vpop.trf.xlu0
  %v477 = vpop.trf.xlu0
  %v478 = vpop.trf.xlu0
  %479 = vmatprep.subr.mxu0 0.0
  %480 = vmatpush1.msra.mxu0 %v415
  %481 = vmatprep.subr.mxu0 0.0
  %482 = vmatpush1.msra.mxu0 %v416
  %483 = vmatprep.subr.mxu0 0.0
  %484 = vmatpush1.msra.mxu0 %v417
  %485 = vmatprep.subr.mxu0 0.0
  %486 = vmatpush1.msra.mxu0 %v418
  %487 = vmatprep.subr.mxu0 0.0
  %488 = vmatpush1.msra.mxu0 %v419
  %489 = vmatprep.subr.mxu0 0.0
  %490 = vmatpush1.msra.mxu0 %v420
  %491 = vmatprep.subr.mxu0 0.0
  %492 = vmatpush1.msra.mxu0 %v421
  %493 = vmatprep.subr.mxu0 0.0
  %494 = vmatpush1.msra.mxu0 %v422
  %495 = vmatprep.subr.mxu0 0.0
  %496 = vmatpush1.msra.mxu0 %v423
  %497 = vmatprep.subr.mxu0 0.0
  %498 = vmatpush1.msra.mxu0 %v424
  %499 = vmatprep.subr.mxu0 0.0
  %500 = vmatpush1.msra.mxu0 %v425
  %501 = vmatprep.subr.mxu0 0.0
  %502 = vmatpush1.msra.mxu0 %v426
  %503 = vmatprep.subr.mxu0 0.0
  %504 = vmatpush1.msra.mxu0 %v427
  %505 = vmatprep.subr.mxu0 0.0
  %506 = vmatpush1.msra.mxu0 %v428
  %507 = vmatprep.subr.mxu0 0.0
  %508 = vmatpush1.msra.mxu0 %v429
  %509 = vmatprep.subr.mxu0 0.0
  %510 = vmatpush1.msra.mxu0 %v430
  %511 = vmatprep.subr.mxu0 0.0
  %512 = vmatpush1.msra.mxu0 0.0
  %513 = vmatprep.subr.mxu0 0.0
  %514 = vmatpush1.msra.mxu0 0.0
  %515 = vmatprep.subr.mxu0 0.0
  %516 = vmatpush1.msra.mxu0 0.0
  %517 = vmatprep.subr.mxu0 0.0
  %518 = vmatpush1.msra.mxu0 0.0
  %519 = vmatprep.subr.mxu0 0.0
  %520 = vmatpush1.msra.mxu0 0.0
  %521 = vmatprep.subr.mxu0 0.0
  %522 = vmatpush1.msra.mxu0 0.0
  %523 = vmatprep.subr.mxu0 0.0
  %524 = vmatpush1.msra.mxu0 0.0
  %525 = vmatprep.subr.mxu0 0.0
  %526 = vmatpush1.msra.mxu0 0.0
  %527 = vmatprep.subr.mxu0 0.0
  %528 = vmatpush1.msra.mxu0 0.0
  %529 = vmatprep.subr.mxu0 0.0
  %530 = vmatpush1.msra.mxu0 0.0
  %531 = vmatprep.subr.mxu0 0.0
  %532 = vmatpush1.msra.mxu0 0.0
  %533 = vmatprep.subr.mxu0 0.0
  %534 = vmatpush1.msra.mxu0 0.0
  %535 = vmatprep.subr.mxu0 0.0
  %536 = vmatpush1.msra.mxu0 0.0
  %537 = vmatprep.subr.mxu0 0.0
  %538 = vmatpush1.msra.mxu0 0.0
  %539 = vmatprep.subr.mxu0 0.0
  %540 = vmatpush1.msra.mxu0 0.0
  %541 = vmatprep.subr.mxu0 0.0
  %542 = vmatpush1.msra.mxu0 0.0
  %543 = vmatprep.mubr.f32.mxu0 0.0
  %544 = vmatmul.mubr.f32.gmra.mrb[0].mxu0 %v463
  %v545 = vpop.f32.mrb[0].mxu0
  %v546 = vadd.f32 0.0, %v545
  %v547 = vpop.f32.mrb[0].mxu0
  %548 = vmatprep.mubr.f32.mxu0 0.0
  %549 = vmatmul.mubr.f32.gmra.mrb[0].mxu0 %v464
  %v550 = vpop.f32.mrb[0].mxu0
  %v551 = vadd.f32 0.0, %v550
  %v552 = vpop.f32.mrb[0].mxu0
  %553 = vmatprep.mubr.f32.mxu0 0.0
  %554 = vmatmul.mubr.f32.gmra.mrb[0].mxu0 %v465
  %v555 = vpop.f32.mrb[0].mxu0
  %v556 = vadd.f32 0.0, %v555
  %v557 = vpop.f32.mrb[0].mxu0
  %558 = vmatprep.mubr.f32.mxu0 0.0
  %559 = vmatmul.mubr.f32.gmra.mrb[0].mxu0 %v466
  %v560 = vpop.f32.mrb[0].mxu0
  %v561 = vadd.f32 0.0, %v560
  %v562 = vpop.f32.mrb[0].mxu0
  %563 = vmatprep.mubr.f32.mxu0 0.0
  %564 = vmatmul.mubr.f32.gmra.mrb[0].mxu0 %v467
  %v565 = vpop.f32.mrb[0].mxu0
  %v566 = vadd.f32 0.0, %v565
  %v567 = vpop.f32.mrb[0].mxu0
  %568 = vmatprep.mubr.f32.mxu0 0.0
  %569 = vmatmul.mubr.f32.gmra.mrb[0].mxu0 %v468
  %v570 = vpop.f32.mrb[0].mxu0
  %v571 = vadd.f32 0.0, %v570
  %v572 = vpop.f32.mrb[0].mxu0
  %573 = vdwg.mxu0
  %vm574 = vcmask 261120
  %v575 = vsel %vm574, %v546, 0.0
  %v576 = vsel %vm574, %v551, 0.0
  %v577 = vsel %vm574, %v556, 0.0
  %v578 = vsel %vm574, %v561, 0.0
  %580 = vrot.lane.b32.xlu0 %v566, 32
  %v581 = vpop.permute.xlu0 %580
  %v583 = vsel %vm574, 0.0, %v581
  %vm584 = vcmask 334848
  %v586 = vsel %vm584, %v431, 0
  %v589 = vsel %vm584, %v432, 0
  %v592 = vsel %vm584, %v433, 0
  %v595 = vsel %vm584, %v434, 0
  %v598 = vsel %vm584, %v435, 0
  %v601 = vsel %vm584, %v436, 0
  %v604 = vsel %vm584, %v437, 0
  %v607 = vsel %vm584, %v438, 0
  %v610 = vsel %vm584, %v439, 0
  %v613 = vsel %vm584, %v440, 0
  %v616 = vsel %vm584, %v441, 0
  %v619 = vsel %vm584, %v442, 0
  %v622 = vsel %vm584, %v443, 0
  %v625 = vsel %vm584, %v444, 0
  %v628 = vsel %vm584, %v445, 0
  %v631 = vsel %vm584, %v446, 0
  %vm633 = vcmask 1040384
  %v635 = vsel %vm633, 0.0, 0
  %637 = vmatprep.subr.mxu0 0.0
  %638 = vmatpush1.msra.mxu0 %v575
  %639 = vmatprep.subr.mxu0 0.0
  %640 = vmatpush1.msra.mxu0 %v576
  %641 = vmatprep.subr.mxu0 0.0
  %642 = vmatpush1.msra.mxu0 %v577
  %643 = vmatprep.subr.mxu0 0.0
  %644 = vmatpush1.msra.mxu0 %v578
  %645 = vmatprep.subr.mxu0 0.0
  %646 = vmatpush1.msra.mxu0 %v583
  %647 = vmatprep.subr.mxu0 0.0
  %648 = vmatpush1.msra.mxu0 %v635
  %649 = vmatprep.subr.mxu0 0.0
  %650 = vmatpush1.msra.mxu0 0.0
  %651 = vmatprep.subr.mxu0 0.0
  %652 = vmatpush1.msra.mxu0 0.0
  %653 = vmatprep.subr.mxu0 0.0
  %654 = vmatpush1.msra.mxu0 0.0
  %655 = vmatprep.subr.mxu0 0.0
  %656 = vmatpush1.msra.mxu0 0.0
  %657 = vmatprep.subr.mxu0 0.0
  %658 = vmatpush1.msra.mxu0 0.0
  %659 = vmatprep.subr.mxu0 0.0
  %660 = vmatpush1.msra.mxu0 0.0
  %661 = vmatprep.subr.mxu0 0.0
  %662 = vmatpush1.msra.mxu0 0.0
  %663 = vmatprep.subr.mxu0 0.0
  %664 = vmatpush1.msra.mxu0 0.0
  %665 = vmatprep.subr.mxu0 0.0
  %666 = vmatpush1.msra.mxu0 0.0
  %667 = vmatprep.subr.mxu0 0.0
  %668 = vmatpush1.msra.mxu0 0.0
  %669 = vmatprep.subr.mxu0 0.0
  %670 = vmatpush1.msra.mxu0 0.0
  %671 = vmatprep.subr.mxu0 0.0
  %672 = vmatpush1.msra.mxu0 0.0
  %673 = vmatprep.subr.mxu0 0.0
  %674 = vmatpush1.msra.mxu0 0.0
  %675 = vmatprep.subr.mxu0 0.0
  %676 = vmatpush1.msra.mxu0 0.0
  %677 = vmatprep.subr.mxu0 0.0
  %678 = vmatpush1.msra.mxu0 0.0
  %679 = vmatprep.subr.mxu0 0.0
  %680 = vmatpush1.msra.mxu0 0.0
  %681 = vmatprep.subr.mxu0 0.0
  %682 = vmatpush1.msra.mxu0 0.0
  %683 = vmatprep.subr.mxu0 0.0
  %684 = vmatpush1.msra.mxu0 0.0
  %685 = vmatprep.subr.mxu0 0.0
  %686 = vmatpush1.msra.mxu0 0.0
  %687 = vmatprep.subr.mxu0 0.0
  %688 = vmatpush1.msra.mxu0 0.0
  %689 = vmatprep.subr.mxu0 0.0
  %690 = vmatpush1.msra.mxu0 0.0
  %691 = vmatprep.subr.mxu0 0.0
  %692 = vmatpush1.msra.mxu0 0.0
  %693 = vmatprep.subr.mxu0 0.0
  %694 = vmatpush1.msra.mxu0 0.0
  %695 = vmatprep.subr.mxu0 0.0
  %696 = vmatpush1.msra.mxu0 0.0
  %697 = vmatprep.subr.mxu0 0.0
  %698 = vmatpush1.msra.mxu0 0.0
  %699 = vmatprep.subr.mxu0 0.0
  %700 = vmatpush1.msra.mxu0 0.0
  %701 = vmatprep.mubr.f32.mxu0 0.0
  %702 = vmatmul.mubr.f32.gmra.mrb[0].mxu0 %v586
  %v703 = vpop.f32.mrb[0].mxu0
  %v704 = vadd.f32 0.0, %v703
  %v705 = vpop.f32.mrb[0].mxu0
  %706 = vmatprep.mubr.f32.mxu0 0.0
  %707 = vmatmul.mubr.f32.gmra.mrb[0].mxu0 %v589
  %v708 = vpop.f32.mrb[0].mxu0
  %v709 = vadd.f32 0.0, %v708
  %v710 = vpop.f32.mrb[0].mxu0
  %711 = vmatprep.mubr.f32.mxu0 0.0
  %712 = vmatmul.mubr.f32.gmra.mrb[0].mxu0 %v592
  %v713 = vpop.f32.mrb[0].mxu0
  %v714 = vadd.f32 0.0, %v713
  %v715 = vpop.f32.mrb[0].mxu0
  %716 = vmatprep.mubr.f32.mxu0 0.0
  %717 = vmatmul.mubr.f32.gmra.mrb[0].mxu0 %v595
  %v718 = vpop.f32.mrb[0].mxu0
  %v719 = vadd.f32 0.0, %v718
  %v720 = vpop.f32.mrb[0].mxu0
  %721 = vmatprep.mubr.f32.mxu0 0.0
  %722 = vmatmul.mubr.f32.gmra.mrb[0].mxu0 %v598
  %v723 = vpop.f32.mrb[0].mxu0
  %v724 = vadd.f32 0.0, %v723
  %v725 = vpop.f32.mrb[0].mxu0
  %726 = vmatprep.mubr.f32.mxu0 0.0
  %727 = vmatmul.mubr.f32.gmra.mrb[0].mxu0 %v601
  %v728 = vpop.f32.mrb[0].mxu0
  %v729 = vadd.f32 0.0, %v728
  %v730 = vpop.f32.mrb[0].mxu0
  %731 = vmatprep.mubr.f32.mxu0 0.0
  %732 = vmatmul.mubr.f32.gmra.mrb[0].mxu0 %v604
  %v733 = vpop.f32.mrb[0].mxu0
  %v734 = vadd.f32 0.0, %v733
  %v735 = vpop.f32.mrb[0].mxu0
  %736 = vmatprep.mubr.f32.mxu0 0.0
  %737 = vmatmul.mubr.f32.gmra.mrb[0].mxu0 %v607
  %v738 = vpop.f32.mrb[0].mxu0
  %v739 = vadd.f32 0.0, %v738
  %v740 = vpop.f32.mrb[0].mxu0
  %741 = vmatprep.mubr.f32.mxu0 0.0
  %742 = vmatmul.mubr.f32.gmra.mrb[0].mxu0 %v610
  %v743 = vpop.f32.mrb[0].mxu0
  %v744 = vadd.f32 0.0, %v743
  %v745 = vpop.f32.mrb[0].mxu0
  %746 = vmatprep.mubr.f32.mxu0 0.0
  %747 = vmatmul.mubr.f32.gmra.mrb[0].mxu0 %v613
  %v748 = vpop.f32.mrb[0].mxu0
  %v749 = vadd.f32 0.0, %v748
  %v750 = vpop.f32.mrb[0].mxu0
  %751 = vmatprep.mubr.f32.mxu0 0.0
  %752 = vmatmul.mubr.f32.gmra.mrb[0].mxu0 %v616
  %v753 = vpop.f32.mrb[0].mxu0
  %v754 = vadd.f32 0.0, %v753
  %v755 = vpop.f32.mrb[0].mxu0
  %756 = vmatprep.mubr.f32.mxu0 0.0
  %757 = vmatmul.mubr.f32.gmra.mrb[0].mxu0 %v619
  %v758 = vpop.f32.mrb[0].mxu0
  %v759 = vadd.f32 0.0, %v758
  %v760 = vpop.f32.mrb[0].mxu0
  %761 = vmatprep.mubr.f32.mxu0 0.0
  %762 = vmatmul.mubr.f32.gmra.mrb[0].mxu0 %v622
  %v763 = vpop.f32.mrb[0].mxu0
  %v764 = vadd.f32 0.0, %v763
  %v765 = vpop.f32.mrb[0].mxu0
  %766 = vmatprep.mubr.f32.mxu0 0.0
  %767 = vmatmul.mubr.f32.gmra.mrb[0].mxu0 %v625
  %v768 = vpop.f32.mrb[0].mxu0
  %v769 = vadd.f32 0.0, %v768
  %v770 = vpop.f32.mrb[0].mxu0
  %771 = vmatprep.mubr.f32.mxu0 0.0
  %772 = vmatmul.mubr.f32.gmra.mrb[0].mxu0 %v628
  %v773 = vpop.f32.mrb[0].mxu0
  %v774 = vadd.f32 0.0, %v773
  %v775 = vpop.f32.mrb[0].mxu0
  %776 = vmatprep.mubr.f32.mxu0 0.0
  %777 = vmatmul.mubr.f32.gmra.mrb[0].mxu0 %v631
  %v778 = vpop.f32.mrb[0].mxu0
  %v779 = vadd.f32 0.0, %v778
  %v780 = vpop.f32.mrb[0].mxu0
  %781 = vdwg.mxu0
  %v782 = vsub.f32 %v415, %v704
  %v783 = vsub.f32 %v416, %v709
  %v784 = vsub.f32 %v417, %v714
  %v785 = vsub.f32 %v418, %v719
  %v786 = vsub.f32 %v419, %v724
  %v787 = vsub.f32 %v420, %v729
  %v788 = vsub.f32 %v421, %v734
  %v789 = vsub.f32 %v422, %v739
  %v790 = vsub.f32 %v423, %v744
  %v791 = vsub.f32 %v424, %v749
  %v792 = vsub.f32 %v425, %v754
  %v793 = vsub.f32 %v426, %v759
  %v794 = vsub.f32 %v427, %v764
  %v795 = vsub.f32 %v428, %v769
  %v796 = vsub.f32 %v429, %v774
  %v797 = vsub.f32 %v430, %v779
  %v798 = vmul.f32 %v782, %v782
  %v799 = vmul.f32 %v783, %v783
  %v800 = vmul.f32 %v784, %v784
  %v801 = vmul.f32 %v785, %v785
  %v802 = vmul.f32 %v786, %v786
  %v803 = vmul.f32 %v787, %v787
  %v804 = vmul.f32 %v788, %v788
  %v805 = vmul.f32 %v789, %v789
  %v806 = vmul.f32 %v790, %v790
  %v807 = vmul.f32 %v791, %v791
  %v808 = vmul.f32 %v792, %v792
  %v809 = vmul.f32 %v793, %v793
  %v810 = vmul.f32 %v794, %v794
  %v811 = vmul.f32 %v795, %v795
  %v812 = vmul.f32 %v796, %v796
  %v813 = vmul.f32 %v797, %v797
  %830 = vrot.lane.b32.xlu0 %v704, 96
  %v831 = vpop.permute.xlu0 %830
  %832 = vrot.lane.b32.xlu0 %v709, 96
  %v833 = vpop.permute.xlu0 %832
  %834 = vrot.lane.b32.xlu0 %v714, 96
  %v835 = vpop.permute.xlu0 %834
  %836 = vrot.lane.b32.xlu0 %v719, 96
  %v837 = vpop.permute.xlu0 %836
  %838 = vrot.lane.b32.xlu0 %v724, 96
  %v839 = vpop.permute.xlu0 %838
  %840 = vrot.lane.b32.xlu0 %v729, 96
  %v841 = vpop.permute.xlu0 %840
  %842 = vrot.lane.b32.xlu0 %v734, 96
  %v843 = vpop.permute.xlu0 %842
  %844 = vrot.lane.b32.xlu0 %v739, 96
  %v845 = vpop.permute.xlu0 %844
  %846 = vrot.lane.b32.xlu0 %v744, 96
  %v847 = vpop.permute.xlu0 %846
  %848 = vrot.lane.b32.xlu0 %v749, 96
  %v849 = vpop.permute.xlu0 %848
  %850 = vrot.lane.b32.xlu0 %v754, 96
  %v851 = vpop.permute.xlu0 %850
  %852 = vrot.lane.b32.xlu0 %v759, 96
  %v853 = vpop.permute.xlu0 %852
  %854 = vrot.lane.b32.xlu0 %v764, 96
  %v855 = vpop.permute.xlu0 %854
  %856 = vrot.lane.b32.xlu0 %v769, 96
  %v857 = vpop.permute.xlu0 %856
  %858 = vrot.lane.b32.xlu0 %v774, 96
  %v859 = vpop.permute.xlu0 %858
  %860 = vrot.lane.b32.xlu0 %v779, 96
  %v861 = vpop.permute.xlu0 %860
  %v878 = vsub.f32 %v704, %v831
  %v879 = vsub.f32 %v709, %v833
  %v880 = vsub.f32 %v714, %v835
  %v881 = vsub.f32 %v719, %v837
  %v882 = vsub.f32 %v724, %v839
  %v883 = vsub.f32 %v729, %v841
  %v884 = vsub.f32 %v734, %v843
  %v885 = vsub.f32 %v739, %v845
  %v886 = vsub.f32 %v744, %v847
  %v887 = vsub.f32 %v749, %v849
  %v888 = vsub.f32 %v754, %v851
  %v889 = vsub.f32 %v759, %v853
  %v890 = vsub.f32 %v764, %v855
  %v891 = vsub.f32 %v769, %v857
  %v892 = vsub.f32 %v774, %v859
  %v893 = vsub.f32 %v779, %v861
  %v894 = vmul.f32 %v878, %v878
  %v895 = vmul.f32 %v879, %v879
  %v896 = vmul.f32 %v880, %v880
  %v897 = vmul.f32 %v881, %v881
  %v898 = vmul.f32 %v882, %v882
  %v899 = vmul.f32 %v883, %v883
  %v900 = vmul.f32 %v884, %v884
  %v901 = vmul.f32 %v885, %v885
  %v902 = vmul.f32 %v886, %v886
  %v903 = vmul.f32 %v887, %v887
  %v904 = vmul.f32 %v888, %v888
  %v905 = vmul.f32 %v889, %v889
  %v906 = vmul.f32 %v890, %v890
  %v907 = vmul.f32 %v891, %v891
  %v908 = vmul.f32 %v892, %v892
  %v909 = vmul.f32 %v893, %v893
  %v910 = vlaneseq
  %v911 = vshrl.u32 %v910, 7
  %v912 = vsub.s32 0, %v911
  %v913 = vrot.slane %v571, %v912
  %v914 = vsub.f32 %v415, %v913
  %v915 = vsub.f32 %v416, %v913
  %v916 = vsub.f32 %v417, %v913
  %v917 = vsub.f32 %v418, %v913
  %v918 = vsub.f32 %v419, %v913
  %v919 = vsub.f32 %v420, %v913
  %v920 = vsub.f32 %v421, %v913
  %v921 = vsub.f32 %v422, %v913
  %v922 = vsub.f32 %v423, %v913
  %v923 = vsub.f32 %v424, %v913
  %v924 = vsub.f32 %v425, %v913
  %v925 = vsub.f32 %v426, %v913
  %v926 = vsub.f32 %v427, %v913
  %v927 = vsub.f32 %v428, %v913
  %v928 = vsub.f32 %v429, %v913
  %v929 = vsub.f32 %v430, %v913
  %v930 = vmul.f32 %v914, %v914
  %v931 = vmul.f32 %v915, %v915
  %v932 = vmul.f32 %v916, %v916
  %v933 = vmul.f32 %v917, %v917
  %v934 = vmul.f32 %v918, %v918
  %v935 = vmul.f32 %v919, %v919
  %v936 = vmul.f32 %v920, %v920
  %v937 = vmul.f32 %v921, %v921
  %v938 = vmul.f32 %v922, %v922
  %v939 = vmul.f32 %v923, %v923
  %v940 = vmul.f32 %v924, %v924
  %v941 = vmul.f32 %v925, %v925
  %v942 = vmul.f32 %v926, %v926
  %v943 = vmul.f32 %v927, %v927
  %v944 = vmul.f32 %v928, %v928
  %v945 = vmul.f32 %v929, %v929
  %962 = vrot.lane.b32.xlu0 %v894, 32
  %v963 = vpop.permute.xlu0 %962
  %964 = vrot.lane.b32.xlu0 %v895, 32
  %v965 = vpop.permute.xlu0 %964
  %966 = vrot.lane.b32.xlu0 %v896, 32
  %v967 = vpop.permute.xlu0 %966
  %968 = vrot.lane.b32.xlu0 %v897, 32
  %v969 = vpop.permute.xlu0 %968
  %970 = vrot.lane.b32.xlu0 %v898, 32
  %v971 = vpop.permute.xlu0 %970
  %972 = vrot.lane.b32.xlu0 %v899, 32
  %v973 = vpop.permute.xlu0 %972
  %974 = vrot.lane.b32.xlu0 %v900, 32
  %v975 = vpop.permute.xlu0 %974
  %976 = vrot.lane.b32.xlu0 %v901, 32
  %v977 = vpop.permute.xlu0 %976
  %978 = vrot.lane.b32.xlu0 %v902, 32
  %v979 = vpop.permute.xlu0 %978
  %980 = vrot.lane.b32.xlu0 %v903, 32
  %v981 = vpop.permute.xlu0 %980
  %982 = vrot.lane.b32.xlu0 %v904, 32
  %v983 = vpop.permute.xlu0 %982
  %984 = vrot.lane.b32.xlu0 %v905, 32
  %v985 = vpop.permute.xlu0 %984
  %986 = vrot.lane.b32.xlu0 %v906, 32
  %v987 = vpop.permute.xlu0 %986
  %988 = vrot.lane.b32.xlu0 %v907, 32
  %v989 = vpop.permute.xlu0 %988
  %990 = vrot.lane.b32.xlu0 %v908, 32
  %v991 = vpop.permute.xlu0 %990
  %992 = vrot.lane.b32.xlu0 %v909, 32
  %v993 = vpop.permute.xlu0 %992
  %1026 = vrot.lane.b32.xlu0 %v930, 64
  %v1027 = vpop.permute.xlu0 %1026
  %1028 = vrot.lane.b32.xlu0 %v931, 64
  %v1029 = vpop.permute.xlu0 %1028
  %1030 = vrot.lane.b32.xlu0 %v932, 64
  %v1031 = vpop.permute.xlu0 %1030
  %1032 = vrot.lane.b32.xlu0 %v933, 64
  %v1033 = vpop.permute.xlu0 %1032
  %1034 = vrot.lane.b32.xlu0 %v934, 64
  %v1035 = vpop.permute.xlu0 %1034
  %1036 = vrot.lane.b32.xlu0 %v935, 64
  %v1037 = vpop.permute.xlu0 %1036
  %1038 = vrot.lane.b32.xlu0 %v936, 64
  %v1039 = vpop.permute.xlu0 %1038
  %1040 = vrot.lane.b32.xlu0 %v937, 64
  %v1041 = vpop.permute.xlu0 %1040
  %1042 = vrot.lane.b32.xlu0 %v938, 64
  %v1043 = vpop.permute.xlu0 %1042
  %1044 = vrot.lane.b32.xlu0 %v939, 64
  %v1045 = vpop.permute.xlu0 %1044
  %1046 = vrot.lane.b32.xlu0 %v940, 64
  %v1047 = vpop.permute.xlu0 %1046
  %1048 = vrot.lane.b32.xlu0 %v941, 64
  %v1049 = vpop.permute.xlu0 %1048
  %1050 = vrot.lane.b32.xlu0 %v942, 64
  %v1051 = vpop.permute.xlu0 %1050
  %1052 = vrot.lane.b32.xlu0 %v943, 64
  %v1053 = vpop.permute.xlu0 %1052
  %1054 = vrot.lane.b32.xlu0 %v944, 64
  %v1055 = vpop.permute.xlu0 %1054
  %1056 = vrot.lane.b32.xlu0 %v945, 64
  %v1057 = vpop.permute.xlu0 %1056
  %v1074 = vsel %vm574, %v798, %v963
  %v1075 = vsel %vm574, %v799, %v965
  %v1076 = vsel %vm574, %v800, %v967
  %v1077 = vsel %vm574, %v801, %v969
  %v1078 = vsel %vm574, %v802, %v971
  %v1079 = vsel %vm574, %v803, %v973
  %v1080 = vsel %vm574, %v804, %v975
  %v1081 = vsel %vm574, %v805, %v977
  %v1082 = vsel %vm574, %v806, %v979
  %v1083 = vsel %vm574, %v807, %v981
  %v1084 = vsel %vm574, %v808, %v983
  %v1085 = vsel %vm574, %v809, %v985
  %v1086 = vsel %vm574, %v810, %v987
  %v1087 = vsel %vm574, %v811, %v989
  %v1088 = vsel %vm574, %v812, %v991
  %v1089 = vsel %vm574, %v813, %v993
  %v1090 = vsel %vm117, %v1074, %v1027
  %v1091 = vsel %vm117, %v1075, %v1029
  %v1092 = vsel %vm117, %v1076, %v1031
  %v1093 = vsel %vm117, %v1077, %v1033
  %v1094 = vsel %vm117, %v1078, %v1035
  %v1095 = vsel %vm117, %v1079, %v1037
  %v1096 = vsel %vm117, %v1080, %v1039
  %v1097 = vsel %vm117, %v1081, %v1041
  %v1098 = vsel %vm117, %v1082, %v1043
  %v1099 = vsel %vm117, %v1083, %v1045
  %v1100 = vsel %vm117, %v1084, %v1047
  %v1101 = vsel %vm117, %v1085, %v1049
  %v1102 = vsel %vm117, %v1086, %v1051
  %v1103 = vsel %vm117, %v1087, %v1053
  %v1104 = vsel %vm117, %v1088, %v1055
  %v1105 = vsel %vm117, %v1089, %v1057
  %vm1106 = vcmask 785408
  %v1107 = vsel %vm1106, %v1090, 1.0
  %v1108 = vsel %vm1106, %v1091, 1.0
  %v1109 = vsel %vm1106, %v1092, 1.0
  %v1110 = vsel %vm1106, %v1093, 1.0
  %v1111 = vsel %vm1106, %v1094, 1.0
  %v1112 = vsel %vm1106, %v1095, 1.0
  %v1113 = vsel %vm1106, %v1096, 1.0
  %v1114 = vsel %vm1106, %v1097, 1.0
  %v1115 = vsel %vm1106, %v1098, 1.0
  %v1116 = vsel %vm1106, %v1099, 1.0
  %v1117 = vsel %vm1106, %v1100, 1.0
  %v1118 = vsel %vm1106, %v1101, 1.0
  %v1119 = vsel %vm1106, %v1102, 1.0
  %v1120 = vsel %vm1106, %v1103, 1.0
  %v1121 = vsel %vm1106, %v1104, 1.0
  %v1122 = vsel %vm1106, %v1105, 1.0
  %1123 = vrot.lane.b32.xlu0 %v431, 96
  %v1124 = vpop.permute.xlu0 %1123
  %1125 = vrot.lane.b32.xlu0 %v432, 96
  %v1126 = vpop.permute.xlu0 %1125
  %1127 = vrot.lane.b32.xlu0 %v433, 96
  %v1128 = vpop.permute.xlu0 %1127
  %1129 = vrot.lane.b32.xlu0 %v434, 96
  %v1130 = vpop.permute.xlu0 %1129
  %1131 = vrot.lane.b32.xlu0 %v435, 96
  %v1132 = vpop.permute.xlu0 %1131
  %1133 = vrot.lane.b32.xlu0 %v436, 96
  %v1134 = vpop.permute.xlu0 %1133
  %1135 = vrot.lane.b32.xlu0 %v437, 96
  %v1136 = vpop.permute.xlu0 %1135
  %1137 = vrot.lane.b32.xlu0 %v438, 96
  %v1138 = vpop.permute.xlu0 %1137
  %1139 = vrot.lane.b32.xlu0 %v439, 96
  %v1140 = vpop.permute.xlu0 %1139
  %1141 = vrot.lane.b32.xlu0 %v440, 96
  %v1142 = vpop.permute.xlu0 %1141
  %1143 = vrot.lane.b32.xlu0 %v441, 96
  %v1144 = vpop.permute.xlu0 %1143
  %1145 = vrot.lane.b32.xlu0 %v442, 96
  %v1146 = vpop.permute.xlu0 %1145
  %1147 = vrot.lane.b32.xlu0 %v443, 96
  %v1148 = vpop.permute.xlu0 %1147
  %1149 = vrot.lane.b32.xlu0 %v444, 96
  %v1150 = vpop.permute.xlu0 %1149
  %1151 = vrot.lane.b32.xlu0 %v445, 96
  %v1152 = vpop.permute.xlu0 %1151
  %1153 = vrot.lane.b32.xlu0 %v446, 96
  %v1154 = vpop.permute.xlu0 %1153
  %1171 = vxpose.xlu0.b32.start [1/16] %v1124, 128
  %1172 = vxpose.xlu0.b32.cont [2/16] %v1126, 128
  %1173 = vxpose.xlu0.b32.cont [3/16] %v1128, 128
  %1174 = vxpose.xlu0.b32.cont [4/16] %v1130, 128
  %1175 = vxpose.xlu0.b32.cont [5/16] %v1132, 128
  %1176 = vxpose.xlu0.b32.cont [6/16] %v1134, 128
  %1177 = vxpose.xlu0.b32.cont [7/16] %v1136, 128
  %1178 = vxpose.xlu0.b32.cont [8/16] %v1138, 128
  %1179 = vxpose.xlu0.b32.cont [9/16] %v1140, 128
  %1180 = vxpose.xlu0.b32.cont [10/16] %v1142, 128
  %1181 = vxpose.xlu0.b32.cont [11/16] %v1144, 128
  %1182 = vxpose.xlu0.b32.cont [12/16] %v1146, 128
  %1183 = vxpose.xlu0.b32.cont [13/16] %v1148, 128
  %1184 = vxpose.xlu0.b32.cont [14/16] %v1150, 128
  %1185 = vxpose.xlu0.b32.cont [15/16] %v1152, 128
  %1186 = vxpose.xlu0.b32.end [16/16] %v1154, 128
  %v1187 = vpop.trf.xlu0
  %v1188 = vpop.trf.xlu0
  %v1189 = vpop.trf.xlu0
  %v1190 = vpop.trf.xlu0
  %v1191 = vpop.trf.xlu0
  %v1192 = vpop.trf.xlu0
  %v1193 = vpop.trf.xlu0
  %v1194 = vpop.trf.xlu0
  %v1195 = vpop.trf.xlu0
  %v1196 = vpop.trf.xlu0
  %v1197 = vpop.trf.xlu0
  %v1198 = vpop.trf.xlu0
  %v1199 = vpop.trf.xlu0
  %v1200 = vpop.trf.xlu0
  %v1201 = vpop.trf.xlu0
  %v1202 = vpop.trf.xlu0
  %1203 = vmatprep.subr.mxu0 0.0
  %1204 = vmatpush1.msra.mxu0 %v1107
  %1205 = vmatprep.subr.mxu0 0.0
  %1206 = vmatpush1.msra.mxu0 %v1108
  %1207 = vmatprep.subr.mxu0 0.0
  %1208 = vmatpush1.msra.mxu0 %v1109
  %1209 = vmatprep.subr.mxu0 0.0
  %1210 = vmatpush1.msra.mxu0 %v1110
  %1211 = vmatprep.subr.mxu0 0.0
  %1212 = vmatpush1.msra.mxu0 %v1111
  %1213 = vmatprep.subr.mxu0 0.0
  %1214 = vmatpush1.msra.mxu0 %v1112
  %1215 = vmatprep.subr.mxu0 0.0
  %1216 = vmatpush1.msra.mxu0 %v1113
  %1217 = vmatprep.subr.mxu0 0.0
  %1218 = vmatpush1.msra.mxu0 %v1114
  %1219 = vmatprep.subr.mxu0 0.0
  %1220 = vmatpush1.msra.mxu0 %v1115
  %1221 = vmatprep.subr.mxu0 0.0
  %1222 = vmatpush1.msra.mxu0 %v1116
  %1223 = vmatprep.subr.mxu0 0.0
  %1224 = vmatpush1.msra.mxu0 %v1117
  %1225 = vmatprep.subr.mxu0 0.0
  %1226 = vmatpush1.msra.mxu0 %v1118
  %1227 = vmatprep.subr.mxu0 0.0
  %1228 = vmatpush1.msra.mxu0 %v1119
  %1229 = vmatprep.subr.mxu0 0.0
  %1230 = vmatpush1.msra.mxu0 %v1120
  %1231 = vmatprep.subr.mxu0 0.0
  %1232 = vmatpush1.msra.mxu0 %v1121
  %1233 = vmatprep.subr.mxu0 0.0
  %1234 = vmatpush1.msra.mxu0 %v1122
  %1235 = vmatprep.subr.mxu0 0.0
  %1236 = vmatpush1.msra.mxu0 0.0
  %1237 = vmatprep.subr.mxu0 0.0
  %1238 = vmatpush1.msra.mxu0 0.0
  %1239 = vmatprep.subr.mxu0 0.0
  %1240 = vmatpush1.msra.mxu0 0.0
  %1241 = vmatprep.subr.mxu0 0.0
  %1242 = vmatpush1.msra.mxu0 0.0
  %1243 = vmatprep.subr.mxu0 0.0
  %1244 = vmatpush1.msra.mxu0 0.0
  %1245 = vmatprep.subr.mxu0 0.0
  %1246 = vmatpush1.msra.mxu0 0.0
  %1247 = vmatprep.subr.mxu0 0.0
  %1248 = vmatpush1.msra.mxu0 0.0
  %1249 = vmatprep.subr.mxu0 0.0
  %1250 = vmatpush1.msra.mxu0 0.0
  %1251 = vmatprep.subr.mxu0 0.0
  %1252 = vmatpush1.msra.mxu0 0.0
  %1253 = vmatprep.subr.mxu0 0.0
  %1254 = vmatpush1.msra.mxu0 0.0
  %1255 = vmatprep.subr.mxu0 0.0
  %1256 = vmatpush1.msra.mxu0 0.0
  %1257 = vmatprep.subr.mxu0 0.0
  %1258 = vmatpush1.msra.mxu0 0.0
  %1259 = vmatprep.subr.mxu0 0.0
  %1260 = vmatpush1.msra.mxu0 0.0
  %1261 = vmatprep.subr.mxu0 0.0
  %1262 = vmatpush1.msra.mxu0 0.0
  %1263 = vmatprep.subr.mxu0 0.0
  %1264 = vmatpush1.msra.mxu0 0.0
  %1265 = vmatprep.subr.mxu0 0.0
  %1266 = vmatpush1.msra.mxu0 0.0
  %1267 = vmatprep.mubr.f32.mxu0 0.0
  %1268 = vmatmul.mubr.f32.gmra.mrb[0].mxu0 %v1187
  %v1269 = vpop.f32.mrb[0].mxu0
  %v1270 = vadd.f32 0.0, %v1269
  %v1271 = vpop.f32.mrb[0].mxu0
  %1272 = vmatprep.mubr.f32.mxu0 0.0
  %1273 = vmatmul.mubr.f32.gmra.mrb[0].mxu0 %v1188
  %v1274 = vpop.f32.mrb[0].mxu0
  %v1275 = vadd.f32 0.0, %v1274
  %v1276 = vpop.f32.mrb[0].mxu0
  %1277 = vdwg.mxu0
  %v1278 = vsel %vm574, %v1270, 0.0
  %1279 = vadd.xlane.f32.xlu0 %v1278
  %v1280 = vpop.xlane.xlu0 %1279
  %1282 = vrot.lane.b32.xlu0 %v1270, 96
  %v1283 = vpop.permute.xlu0 %1282
  %v1285 = vsel %vm574, %v1283, 0.0
  %1286 = vadd.xlane.f32.xlu0 %v1285
  %v1287 = vpop.xlane.xlu0 %1286
  %1289 = vrot.lane.b32.xlu0 %v1275, 64
  %v1290 = vpop.permute.xlu0 %1289
  %vm1292 = vcmask 253952
  %v1293 = vsel %vm1292, %v1290, 0.0
  %1294 = vadd.xlane.f32.xlu0 %v1293
  %v1295 = vpop.xlane.xlu0 %1294
  %v1296 = vrot.slane %v1295, 4
  %v1297 = vadd.f32 %v1295, %v1296
  %v1298 = vrot.slane %v1297, 2
  %v1299 = vadd.f32 %v1297, %v1298
  %v1300 = vrot.slane %v1299, 1
  %v1301 = vadd.f32 %v1299, %v1300
  %s1302 = vtos %v1301
  %v1303 = vadd.f32 %v1275, 0.0
  %1305 = vrot.lane.b32.xlu0 %v1303, 32
  %v1306 = vpop.permute.xlu0 %1305
  %s1308 = vtos %v1306
  %s1309 = ssub.f32 %s1308, 1.0
  %s1310 = smax.f32 %s1309, 1.0
  %v1311 = vstv %s1310
  %v1312 = vrcp.pop %v1311
  %s1313 = vtos %v1312
  %s1314 = smul.f32 %s1302, %s1313
  %v1315 = vsub.f32 %v1270, 1.0
  %v1316 = vmax.f32 %v1315, 1.0
  %v1317 = vrcp.pop %v1316
  %v1318 = vmul.f32 %v1280, %v1317
  %v1319 = vmul.f32 %v1287, %v1317
  %v1320 = vstv %s1314
  %v1321 = vsub.f32 %v1320, %v1319
  %v1322 = vmax.f32 %v1318, 1e-06
  %v1323 = vrcp.pop %v1322
  %v1324 = vmul.f32 %v1321, %v1323
  %vm1325 = vcmp.gt.f32.partialorder %v1324, 0.0
  %v1326 = vmax.f32 %v1324, 0.0
  %v1327 = vrsqrt.pop %v1326
  %v1328 = vmul.f32 %v1326, %v1327
  %vm1329 = vcmp.eq.f32.partialorder %v1326, inf
  %v1330 = vsel %vm1329, %v1326, %v1328
  %vm1331 = vcmp.eq.f32.partialorder %v1326, 0.0
  %v1332 = vand.u32 %v1326, 2147483648
  %v1333 = vsel %vm1331, %v1332, %v1330
  %v1334 = vsel %vm1325, %v1333, 0.0
  %v1335 = vpack.c.bf16 %v416, %v415
  %v1336 = vpack.c.bf16 %v418, %v417
  %v1337 = vpack.c.bf16 %v420, %v419
  %v1338 = vpack.c.bf16 %v422, %v421
  %v1339 = vpack.c.bf16 %v424, %v423
  %v1340 = vpack.c.bf16 %v426, %v425
  %v1341 = vpack.c.bf16 %v428, %v427
  %v1342 = vpack.c.bf16 %v430, %v429
  %v1343 = vld [vmem:[%s4] sm:$0xf]
  %v1344 = vld [vmem:[%s4 + $0x4] sm:$0xf]
  %v1345 = vld [vmem:[%s4 + $0x8] sm:$0xf]
  %v1346 = vld [vmem:[%s4 + $0xc] sm:$0xf]
  %v1351 = vunpack.c.l.b16 %v1343
  %v1352 = vunpack.c.l.b16 %v1344
  %v1353 = vunpack.c.l.b16 %v1345
  %v1354 = vunpack.c.l.b16 %v1346
  %v1355 = vpack.c.b16 %v1352, %v1351
  %v1356 = vpack.c.b16 %v1354, %v1353
  %v1360 = vsel %vm574, %v1335, 0
  %v1363 = vsel %vm574, %v1336, 0
  %v1366 = vsel %vm574, %v1337, 0
  %v1369 = vsel %vm574, %v1338, 0
  %v1372 = vsel %vm574, %v1339, 0
  %v1375 = vsel %vm574, %v1340, 0
  %v1378 = vsel %vm574, %v1341, 0
  %v1381 = vsel %vm574, %v1342, 0
  %1383 = vmatprep.subr.bf16.mxu0 0
  %1384 = vmatpush1.bf16.msra.mxu0 %v1355
  %1385 = vmatprep.subr.bf16.mxu0 0
  %1386 = vmatpush1.bf16.msra.mxu0 %v1356
  %1387 = vmatprep.subr.bf16.mxu0 0
  %1388 = vmatpush1.bf16.msra.mxu0 0
  %1389 = vmatprep.subr.bf16.mxu0 0
  %1390 = vmatpush1.bf16.msra.mxu0 0
  %1391 = vmatprep.subr.bf16.mxu0 0
  %1392 = vmatpush1.bf16.msra.mxu0 0
  %1393 = vmatprep.subr.bf16.mxu0 0
  %1394 = vmatpush1.bf16.msra.mxu0 0
  %1395 = vmatprep.subr.bf16.mxu0 0
  %1396 = vmatpush1.bf16.msra.mxu0 0
  %1397 = vmatprep.subr.bf16.mxu0 0
  %1398 = vmatpush1.bf16.msra.mxu0 0
  %1399 = vmatprep.subr.bf16.mxu0 0
  %1400 = vmatpush1.bf16.msra.mxu0 0
  %1401 = vmatprep.subr.bf16.mxu0 0
  %1402 = vmatpush1.bf16.msra.mxu0 0
  %1403 = vmatprep.subr.bf16.mxu0 0
  %1404 = vmatpush1.bf16.msra.mxu0 0
  %1405 = vmatprep.subr.bf16.mxu0 0
  %1406 = vmatpush1.bf16.msra.mxu0 0
  %1407 = vmatprep.subr.bf16.mxu0 0
  %1408 = vmatpush1.bf16.msra.mxu0 0
  %1409 = vmatprep.subr.bf16.mxu0 0
  %1410 = vmatpush1.bf16.msra.mxu0 0
  %1411 = vmatprep.subr.bf16.mxu0 0
  %1412 = vmatpush1.bf16.msra.mxu0 0
  %1413 = vmatprep.subr.bf16.mxu0 0
  %1414 = vmatpush1.bf16.msra.mxu0 0
  %1415 = vmatprep.mubr.bf16.mxu0 0
  %1416 = vmatmul.mubr.bf16.gmra.mrb[0].mxu0 %v1360
  %v1417 = vpop.f32.mrb[0].mxu0
  %v1418 = vadd.f32 0.0, %v1417
  %v1419 = vpop.f32.mrb[0].mxu0
  %v1420 = vpop.f32.mrb[0].mxu0
  %v1421 = vadd.f32 0.0, %v1420
  %v1422 = vpop.f32.mrb[0].mxu0
  %1423 = vmatprep.mubr.bf16.mxu0 0
  %1424 = vmatmul.mubr.bf16.gmra.mrb[0].mxu0 %v1363
  %v1425 = vpop.f32.mrb[0].mxu0
  %v1426 = vadd.f32 0.0, %v1425
  %v1427 = vpop.f32.mrb[0].mxu0
  %v1428 = vpop.f32.mrb[0].mxu0
  %v1429 = vadd.f32 0.0, %v1428
  %v1430 = vpop.f32.mrb[0].mxu0
  %1431 = vmatprep.mubr.bf16.mxu0 0
  %1432 = vmatmul.mubr.bf16.gmra.mrb[0].mxu0 %v1366
  %v1433 = vpop.f32.mrb[0].mxu0
  %v1434 = vadd.f32 0.0, %v1433
  %v1435 = vpop.f32.mrb[0].mxu0
  %v1436 = vpop.f32.mrb[0].mxu0
  %v1437 = vadd.f32 0.0, %v1436
  %v1438 = vpop.f32.mrb[0].mxu0
  %1439 = vmatprep.mubr.bf16.mxu0 0
  %1440 = vmatmul.mubr.bf16.gmra.mrb[0].mxu0 %v1369
  %v1441 = vpop.f32.mrb[0].mxu0
  %v1442 = vadd.f32 0.0, %v1441
  %v1443 = vpop.f32.mrb[0].mxu0
  %v1444 = vpop.f32.mrb[0].mxu0
  %v1445 = vadd.f32 0.0, %v1444
  %v1446 = vpop.f32.mrb[0].mxu0
  %1447 = vmatprep.mubr.bf16.mxu0 0
  %1448 = vmatmul.mubr.bf16.gmra.mrb[0].mxu0 %v1372
  %v1449 = vpop.f32.mrb[0].mxu0
  %v1450 = vadd.f32 0.0, %v1449
  %v1451 = vpop.f32.mrb[0].mxu0
  %v1452 = vpop.f32.mrb[0].mxu0
  %v1453 = vadd.f32 0.0, %v1452
  %v1454 = vpop.f32.mrb[0].mxu0
  %1455 = vmatprep.mubr.bf16.mxu0 0
  %1456 = vmatmul.mubr.bf16.gmra.mrb[0].mxu0 %v1375
  %v1457 = vpop.f32.mrb[0].mxu0
  %v1458 = vadd.f32 0.0, %v1457
  %v1459 = vpop.f32.mrb[0].mxu0
  %v1460 = vpop.f32.mrb[0].mxu0
  %v1461 = vadd.f32 0.0, %v1460
  %v1462 = vpop.f32.mrb[0].mxu0
  %1463 = vmatprep.mubr.bf16.mxu0 0
  %1464 = vmatmul.mubr.bf16.gmra.mrb[0].mxu0 %v1378
  %v1465 = vpop.f32.mrb[0].mxu0
  %v1466 = vadd.f32 0.0, %v1465
  %v1467 = vpop.f32.mrb[0].mxu0
  %v1468 = vpop.f32.mrb[0].mxu0
  %v1469 = vadd.f32 0.0, %v1468
  %v1470 = vpop.f32.mrb[0].mxu0
  %1471 = vmatprep.mubr.bf16.mxu0 0
  %1472 = vmatmul.mubr.bf16.gmra.mrb[0].mxu0 %v1381
  %v1473 = vpop.f32.mrb[0].mxu0
  %v1474 = vadd.f32 0.0, %v1473
  %v1475 = vpop.f32.mrb[0].mxu0
  %v1476 = vpop.f32.mrb[0].mxu0
  %v1477 = vadd.f32 0.0, %v1476
  %v1478 = vpop.f32.mrb[0].mxu0
  %1479 = vdwg.mxu0
  %v1480 = vpack.c.bf16 %v1421, %v1418
  %v1481 = vpack.c.bf16 %v1429, %v1426
  %v1482 = vpack.c.bf16 %v1437, %v1434
  %v1483 = vpack.c.bf16 %v1445, %v1442
  %v1484 = vpack.c.bf16 %v1453, %v1450
  %v1485 = vpack.c.bf16 %v1461, %v1458
  %v1486 = vpack.c.bf16 %v1469, %v1466
  %v1487 = vpack.c.bf16 %v1477, %v1474
  %v1488 = vld [vmem:[%s5] sm:$0x1]
  %v1490 = vlaneseq
  %v1491 = vshrl.u32 %v1490, 7
  %v1492 = vsub.s32 0, %v1491
  %v1493 = vrot.slane %v1488, %v1492
  %1495 = vmatprep.subr.bf16.mxu0 0
  %1496 = vmatpush1.bf16.msra.mxu0 %v1480
  %1497 = vmatprep.subr.bf16.mxu0 0
  %1498 = vmatpush1.bf16.msra.mxu0 %v1481
  %1499 = vmatprep.subr.bf16.mxu0 0
  %1500 = vmatpush1.bf16.msra.mxu0 %v1482
  %1501 = vmatprep.subr.bf16.mxu0 0
  %1502 = vmatpush1.bf16.msra.mxu0 %v1483
  %1503 = vmatprep.subr.bf16.mxu0 0
  %1504 = vmatpush1.bf16.msra.mxu0 %v1484
  %1505 = vmatprep.subr.bf16.mxu0 0
  %1506 = vmatpush1.bf16.msra.mxu0 %v1485
  %1507 = vmatprep.subr.bf16.mxu0 0
  %1508 = vmatpush1.bf16.msra.mxu0 %v1486
  %1509 = vmatprep.subr.bf16.mxu0 0
  %1510 = vmatpush1.bf16.msra.mxu0 %v1487
  %1511 = vmatprep.subr.bf16.mxu0 0
  %1512 = vmatpush1.bf16.msra.mxu0 0
  %1513 = vmatprep.subr.bf16.mxu0 0
  %1514 = vmatpush1.bf16.msra.mxu0 0
  %1515 = vmatprep.subr.bf16.mxu0 0
  %1516 = vmatpush1.bf16.msra.mxu0 0
  %1517 = vmatprep.subr.bf16.mxu0 0
  %1518 = vmatpush1.bf16.msra.mxu0 0
  %1519 = vmatprep.subr.bf16.mxu0 0
  %1520 = vmatpush1.bf16.msra.mxu0 0
  %1521 = vmatprep.subr.bf16.mxu0 0
  %1522 = vmatpush1.bf16.msra.mxu0 0
  %1523 = vmatprep.subr.bf16.mxu0 0
  %1524 = vmatpush1.bf16.msra.mxu0 0
  %1525 = vmatprep.subr.bf16.mxu0 0
  %1526 = vmatpush1.bf16.msra.mxu0 0
  %1527 = vmatprep.mubr.bf16.mxu0 0
  %1528 = vmatmul.mubr.bf16.gmra.mrb[0].mxu0 %v302
  %v1529 = vpop.f32.mrb[0].mxu0
  %v1530 = vadd.f32 %v1493, %v1529
  %v1531 = vpop.f32.mrb[0].mxu0
  %v1532 = vpop.f32.mrb[0].mxu0
  %v1533 = vadd.f32 %v1493, %v1532
  %v1534 = vpop.f32.mrb[0].mxu0
  %1535 = vmatprep.mubr.bf16.mxu0 0
  %1536 = vmatmul.mubr.bf16.gmra.mrb[0].mxu0 %v303
  %v1537 = vpop.f32.mrb[0].mxu0
  %v1538 = vadd.f32 %v1493, %v1537
  %v1539 = vpop.f32.mrb[0].mxu0
  %v1540 = vpop.f32.mrb[0].mxu0
  %v1541 = vadd.f32 %v1493, %v1540
  %v1542 = vpop.f32.mrb[0].mxu0
  %1543 = vmatprep.mubr.bf16.mxu0 0
  %1544 = vmatmul.mubr.bf16.gmra.mrb[0].mxu0 %v304
  %v1545 = vpop.f32.mrb[0].mxu0
  %v1546 = vadd.f32 %v1493, %v1545
  %v1547 = vpop.f32.mrb[0].mxu0
  %v1548 = vpop.f32.mrb[0].mxu0
  %v1549 = vadd.f32 %v1493, %v1548
  %v1550 = vpop.f32.mrb[0].mxu0
  %1551 = vmatprep.mubr.bf16.mxu0 0
  %1552 = vmatmul.mubr.bf16.gmra.mrb[0].mxu0 %v305
  %v1553 = vpop.f32.mrb[0].mxu0
  %v1554 = vadd.f32 %v1493, %v1553
  %v1555 = vpop.f32.mrb[0].mxu0
  %v1556 = vpop.f32.mrb[0].mxu0
  %v1557 = vadd.f32 %v1493, %v1556
  %v1558 = vpop.f32.mrb[0].mxu0
  %1559 = vmatprep.mubr.bf16.mxu0 0
  %1560 = vmatmul.mubr.bf16.gmra.mrb[0].mxu0 %v306
  %v1561 = vpop.f32.mrb[0].mxu0
  %v1562 = vadd.f32 %v1493, %v1561
  %v1563 = vpop.f32.mrb[0].mxu0
  %v1564 = vpop.f32.mrb[0].mxu0
  %v1565 = vadd.f32 %v1493, %v1564
  %v1566 = vpop.f32.mrb[0].mxu0
  %1567 = vmatprep.mubr.bf16.mxu0 0
  %1568 = vmatmul.mubr.bf16.gmra.mrb[0].mxu0 %v307
  %v1569 = vpop.f32.mrb[0].mxu0
  %v1570 = vadd.f32 %v1493, %v1569
  %v1571 = vpop.f32.mrb[0].mxu0
  %v1572 = vpop.f32.mrb[0].mxu0
  %v1573 = vadd.f32 %v1493, %v1572
  %v1574 = vpop.f32.mrb[0].mxu0
  %1575 = vmatprep.mubr.bf16.mxu0 0
  %1576 = vmatmul.mubr.bf16.gmra.mrb[0].mxu0 %v308
  %v1577 = vpop.f32.mrb[0].mxu0
  %v1578 = vadd.f32 %v1493, %v1577
  %v1579 = vpop.f32.mrb[0].mxu0
  %v1580 = vpop.f32.mrb[0].mxu0
  %v1581 = vadd.f32 %v1493, %v1580
  %v1582 = vpop.f32.mrb[0].mxu0
  %1583 = vmatprep.mubr.bf16.mxu0 0
  %1584 = vmatmul.mubr.bf16.gmra.mrb[0].mxu0 %v309
  %v1585 = vpop.f32.mrb[0].mxu0
  %v1586 = vadd.f32 %v1493, %v1585
  %v1587 = vpop.f32.mrb[0].mxu0
  %v1588 = vpop.f32.mrb[0].mxu0
  %v1589 = vadd.f32 %v1493, %v1588
  %v1590 = vpop.f32.mrb[0].mxu0
  %1591 = vdwg.mxu0
  %1592 = vmatprep.subr.mxu0 0.0
  %1593 = vmatpush1.msra.mxu0 %v1530
  %1594 = vmatprep.subr.mxu0 0.0
  %1595 = vmatpush1.msra.mxu0 %v1533
  %1596 = vmatprep.subr.mxu0 0.0
  %1597 = vmatpush1.msra.mxu0 %v1538
  %1598 = vmatprep.subr.mxu0 0.0
  %1599 = vmatpush1.msra.mxu0 %v1541
  %1600 = vmatprep.subr.mxu0 0.0
  %1601 = vmatpush1.msra.mxu0 %v1546
  %1602 = vmatprep.subr.mxu0 0.0
  %1603 = vmatpush1.msra.mxu0 %v1549
  %1604 = vmatprep.subr.mxu0 0.0
  %1605 = vmatpush1.msra.mxu0 %v1554
  %1606 = vmatprep.subr.mxu0 0.0
  %1607 = vmatpush1.msra.mxu0 %v1557
  %1608 = vmatprep.subr.mxu0 0.0
  %1609 = vmatpush1.msra.mxu0 %v1562
  %1610 = vmatprep.subr.mxu0 0.0
  %1611 = vmatpush1.msra.mxu0 %v1565
  %1612 = vmatprep.subr.mxu0 0.0
  %1613 = vmatpush1.msra.mxu0 %v1570
  %1614 = vmatprep.subr.mxu0 0.0
  %1615 = vmatpush1.msra.mxu0 %v1573
  %1616 = vmatprep.subr.mxu0 0.0
  %1617 = vmatpush1.msra.mxu0 %v1578
  %1618 = vmatprep.subr.mxu0 0.0
  %1619 = vmatpush1.msra.mxu0 %v1581
  %1620 = vmatprep.subr.mxu0 0.0
  %1621 = vmatpush1.msra.mxu0 %v1586
  %1622 = vmatprep.subr.mxu0 0.0
  %1623 = vmatpush1.msra.mxu0 %v1589
  %1624 = vmatprep.subr.mxu0 0.0
  %1625 = vmatpush1.msra.mxu0 0.0
  %1626 = vmatprep.subr.mxu0 0.0
  %1627 = vmatpush1.msra.mxu0 0.0
  %1628 = vmatprep.subr.mxu0 0.0
  %1629 = vmatpush1.msra.mxu0 0.0
  %1630 = vmatprep.subr.mxu0 0.0
  %1631 = vmatpush1.msra.mxu0 0.0
  %1632 = vmatprep.subr.mxu0 0.0
  %1633 = vmatpush1.msra.mxu0 0.0
  %1634 = vmatprep.subr.mxu0 0.0
  %1635 = vmatpush1.msra.mxu0 0.0
  %1636 = vmatprep.subr.mxu0 0.0
  %1637 = vmatpush1.msra.mxu0 0.0
  %1638 = vmatprep.subr.mxu0 0.0
  %1639 = vmatpush1.msra.mxu0 0.0
  %1640 = vmatprep.subr.mxu0 0.0
  %1641 = vmatpush1.msra.mxu0 0.0
  %1642 = vmatprep.subr.mxu0 0.0
  %1643 = vmatpush1.msra.mxu0 0.0
  %1644 = vmatprep.subr.mxu0 0.0
  %1645 = vmatpush1.msra.mxu0 0.0
  %1646 = vmatprep.subr.mxu0 0.0
  %1647 = vmatpush1.msra.mxu0 0.0
  %1648 = vmatprep.subr.mxu0 0.0
  %1649 = vmatpush1.msra.mxu0 0.0
  %1650 = vmatprep.subr.mxu0 0.0
  %1651 = vmatpush1.msra.mxu0 0.0
  %1652 = vmatprep.subr.mxu0 0.0
  %1653 = vmatpush1.msra.mxu0 0.0
  %1654 = vmatprep.subr.mxu0 0.0
  %1655 = vmatpush1.msra.mxu0 0.0
  %1656 = vmatprep.mubr.f32.mxu0 0.0
  %1657 = vmatmul.mubr.f32.gmra.mrb[0].mxu0 %v463
  %v1658 = vpop.f32.mrb[0].mxu0
  %v1659 = vadd.f32 0.0, %v1658
  %v1660 = vpop.f32.mrb[0].mxu0
  %1661 = vmatprep.mubr.f32.mxu0 0.0
  %1662 = vmatmul.mubr.f32.gmra.mrb[0].mxu0 %v464
  %v1663 = vpop.f32.mrb[0].mxu0
  %v1664 = vadd.f32 0.0, %v1663
  %v1665 = vpop.f32.mrb[0].mxu0
  %1666 = vmatprep.mubr.f32.mxu0 0.0
  %1667 = vmatmul.mubr.f32.gmra.mrb[0].mxu0 %v465
  %v1668 = vpop.f32.mrb[0].mxu0
  %v1669 = vadd.f32 0.0, %v1668
  %v1670 = vpop.f32.mrb[0].mxu0
  %1671 = vmatprep.mubr.f32.mxu0 0.0
  %1672 = vmatmul.mubr.f32.gmra.mrb[0].mxu0 %v466
  %v1673 = vpop.f32.mrb[0].mxu0
  %v1674 = vadd.f32 0.0, %v1673
  %v1675 = vpop.f32.mrb[0].mxu0
  %1676 = vmatprep.mubr.f32.mxu0 0.0
  %1677 = vmatmul.mubr.f32.gmra.mrb[0].mxu0 %v467
  %v1678 = vpop.f32.mrb[0].mxu0
  %v1679 = vadd.f32 0.0, %v1678
  %v1680 = vpop.f32.mrb[0].mxu0
  %1681 = vmatprep.mubr.f32.mxu0 0.0
  %1682 = vmatmul.mubr.f32.gmra.mrb[0].mxu0 %v468
  %v1683 = vpop.f32.mrb[0].mxu0
  %v1684 = vadd.f32 0.0, %v1683
  %v1685 = vpop.f32.mrb[0].mxu0
  %1686 = vdwg.mxu0
  %vm1687 = vcmask 130048
  %v1688 = vsel %vm1687, %v1659, 0.0
  %v1689 = vsel %vm1687, %v1664, 0.0
  %v1690 = vsel %vm1687, %v1669, 0.0
  %v1691 = vsel %vm1687, %v1674, 0.0
  %1693 = vrot.lane.b32.xlu0 %v1679, 16
  %v1694 = vpop.permute.xlu0 %1693
  %v1696 = vsel %vm1687, 0.0, %v1694
  %1697 = vmatprep.subr.mxu0 0.0
  %1698 = vmatpush1.msra.mxu0 %v1688
  %1699 = vmatprep.subr.mxu0 0.0
  %1700 = vmatpush1.msra.mxu0 %v1689
  %1701 = vmatprep.subr.mxu0 0.0
  %1702 = vmatpush1.msra.mxu0 %v1690
  %1703 = vmatprep.subr.mxu0 0.0
  %1704 = vmatpush1.msra.mxu0 %v1691
  %1705 = vmatprep.subr.mxu0 0.0
  %1706 = vmatpush1.msra.mxu0 %v1696
  %1707 = vmatprep.subr.mxu0 0.0
  %1708 = vmatpush1.msra.mxu0 %v635
  %1709 = vmatprep.subr.mxu0 0.0
  %1710 = vmatpush1.msra.mxu0 0.0
  %1711 = vmatprep.subr.mxu0 0.0
  %1712 = vmatpush1.msra.mxu0 0.0
  %1713 = vmatprep.subr.mxu0 0.0
  %1714 = vmatpush1.msra.mxu0 0.0
  %1715 = vmatprep.subr.mxu0 0.0
  %1716 = vmatpush1.msra.mxu0 0.0
  %1717 = vmatprep.subr.mxu0 0.0
  %1718 = vmatpush1.msra.mxu0 0.0
  %1719 = vmatprep.subr.mxu0 0.0
  %1720 = vmatpush1.msra.mxu0 0.0
  %1721 = vmatprep.subr.mxu0 0.0
  %1722 = vmatpush1.msra.mxu0 0.0
  %1723 = vmatprep.subr.mxu0 0.0
  %1724 = vmatpush1.msra.mxu0 0.0
  %1725 = vmatprep.subr.mxu0 0.0
  %1726 = vmatpush1.msra.mxu0 0.0
  %1727 = vmatprep.subr.mxu0 0.0
  %1728 = vmatpush1.msra.mxu0 0.0
  %1729 = vmatprep.subr.mxu0 0.0
  %1730 = vmatpush1.msra.mxu0 0.0
  %1731 = vmatprep.subr.mxu0 0.0
  %1732 = vmatpush1.msra.mxu0 0.0
  %1733 = vmatprep.subr.mxu0 0.0
  %1734 = vmatpush1.msra.mxu0 0.0
  %1735 = vmatprep.subr.mxu0 0.0
  %1736 = vmatpush1.msra.mxu0 0.0
  %1737 = vmatprep.subr.mxu0 0.0
  %1738 = vmatpush1.msra.mxu0 0.0
  %1739 = vmatprep.subr.mxu0 0.0
  %1740 = vmatpush1.msra.mxu0 0.0
  %1741 = vmatprep.subr.mxu0 0.0
  %1742 = vmatpush1.msra.mxu0 0.0
  %1743 = vmatprep.subr.mxu0 0.0
  %1744 = vmatpush1.msra.mxu0 0.0
  %1745 = vmatprep.subr.mxu0 0.0
  %1746 = vmatpush1.msra.mxu0 0.0
  %1747 = vmatprep.subr.mxu0 0.0
  %1748 = vmatpush1.msra.mxu0 0.0
  %1749 = vmatprep.subr.mxu0 0.0
  %1750 = vmatpush1.msra.mxu0 0.0
  %1751 = vmatprep.subr.mxu0 0.0
  %1752 = vmatpush1.msra.mxu0 0.0
  %1753 = vmatprep.subr.mxu0 0.0
  %1754 = vmatpush1.msra.mxu0 0.0
  %1755 = vmatprep.subr.mxu0 0.0
  %1756 = vmatpush1.msra.mxu0 0.0
  %1757 = vmatprep.subr.mxu0 0.0
  %1758 = vmatpush1.msra.mxu0 0.0
  %1759 = vmatprep.subr.mxu0 0.0
  %1760 = vmatpush1.msra.mxu0 0.0
  %1761 = vmatprep.mubr.f32.mxu0 0.0
  %1762 = vmatmul.mubr.f32.gmra.mrb[0].mxu0 %v586
  %v1763 = vpop.f32.mrb[0].mxu0
  %v1764 = vadd.f32 0.0, %v1763
  %v1765 = vpop.f32.mrb[0].mxu0
  %1766 = vmatprep.mubr.f32.mxu0 0.0
  %1767 = vmatmul.mubr.f32.gmra.mrb[0].mxu0 %v589
  %v1768 = vpop.f32.mrb[0].mxu0
  %v1769 = vadd.f32 0.0, %v1768
  %v1770 = vpop.f32.mrb[0].mxu0
  %1771 = vmatprep.mubr.f32.mxu0 0.0
  %1772 = vmatmul.mubr.f32.gmra.mrb[0].mxu0 %v592
  %v1773 = vpop.f32.mrb[0].mxu0
  %v1774 = vadd.f32 0.0, %v1773
  %v1775 = vpop.f32.mrb[0].mxu0
  %1776 = vmatprep.mubr.f32.mxu0 0.0
  %1777 = vmatmul.mubr.f32.gmra.mrb[0].mxu0 %v595
  %v1778 = vpop.f32.mrb[0].mxu0
  %v1779 = vadd.f32 0.0, %v1778
  %v1780 = vpop.f32.mrb[0].mxu0
  %1781 = vmatprep.mubr.f32.mxu0 0.0
  %1782 = vmatmul.mubr.f32.gmra.mrb[0].mxu0 %v598
  %v1783 = vpop.f32.mrb[0].mxu0
  %v1784 = vadd.f32 0.0, %v1783
  %v1785 = vpop.f32.mrb[0].mxu0
  %1786 = vmatprep.mubr.f32.mxu0 0.0
  %1787 = vmatmul.mubr.f32.gmra.mrb[0].mxu0 %v601
  %v1788 = vpop.f32.mrb[0].mxu0
  %v1789 = vadd.f32 0.0, %v1788
  %v1790 = vpop.f32.mrb[0].mxu0
  %1791 = vmatprep.mubr.f32.mxu0 0.0
  %1792 = vmatmul.mubr.f32.gmra.mrb[0].mxu0 %v604
  %v1793 = vpop.f32.mrb[0].mxu0
  %v1794 = vadd.f32 0.0, %v1793
  %v1795 = vpop.f32.mrb[0].mxu0
  %1796 = vmatprep.mubr.f32.mxu0 0.0
  %1797 = vmatmul.mubr.f32.gmra.mrb[0].mxu0 %v607
  %v1798 = vpop.f32.mrb[0].mxu0
  %v1799 = vadd.f32 0.0, %v1798
  %v1800 = vpop.f32.mrb[0].mxu0
  %1801 = vmatprep.mubr.f32.mxu0 0.0
  %1802 = vmatmul.mubr.f32.gmra.mrb[0].mxu0 %v610
  %v1803 = vpop.f32.mrb[0].mxu0
  %v1804 = vadd.f32 0.0, %v1803
  %v1805 = vpop.f32.mrb[0].mxu0
  %1806 = vmatprep.mubr.f32.mxu0 0.0
  %1807 = vmatmul.mubr.f32.gmra.mrb[0].mxu0 %v613
  %v1808 = vpop.f32.mrb[0].mxu0
  %v1809 = vadd.f32 0.0, %v1808
  %v1810 = vpop.f32.mrb[0].mxu0
  %1811 = vmatprep.mubr.f32.mxu0 0.0
  %1812 = vmatmul.mubr.f32.gmra.mrb[0].mxu0 %v616
  %v1813 = vpop.f32.mrb[0].mxu0
  %v1814 = vadd.f32 0.0, %v1813
  %v1815 = vpop.f32.mrb[0].mxu0
  %1816 = vmatprep.mubr.f32.mxu0 0.0
  %1817 = vmatmul.mubr.f32.gmra.mrb[0].mxu0 %v619
  %v1818 = vpop.f32.mrb[0].mxu0
  %v1819 = vadd.f32 0.0, %v1818
  %v1820 = vpop.f32.mrb[0].mxu0
  %1821 = vmatprep.mubr.f32.mxu0 0.0
  %1822 = vmatmul.mubr.f32.gmra.mrb[0].mxu0 %v622
  %v1823 = vpop.f32.mrb[0].mxu0
  %v1824 = vadd.f32 0.0, %v1823
  %v1825 = vpop.f32.mrb[0].mxu0
  %1826 = vmatprep.mubr.f32.mxu0 0.0
  %1827 = vmatmul.mubr.f32.gmra.mrb[0].mxu0 %v625
  %v1828 = vpop.f32.mrb[0].mxu0
  %v1829 = vadd.f32 0.0, %v1828
  %v1830 = vpop.f32.mrb[0].mxu0
  %1831 = vmatprep.mubr.f32.mxu0 0.0
  %1832 = vmatmul.mubr.f32.gmra.mrb[0].mxu0 %v628
  %v1833 = vpop.f32.mrb[0].mxu0
  %v1834 = vadd.f32 0.0, %v1833
  %v1835 = vpop.f32.mrb[0].mxu0
  %1836 = vmatprep.mubr.f32.mxu0 0.0
  %1837 = vmatmul.mubr.f32.gmra.mrb[0].mxu0 %v631
  %v1838 = vpop.f32.mrb[0].mxu0
  %v1839 = vadd.f32 0.0, %v1838
  %v1840 = vpop.f32.mrb[0].mxu0
  %1841 = vdwg.mxu0
  %v1842 = vsub.f32 %v1530, %v1764
  %v1843 = vsub.f32 %v1533, %v1769
  %v1844 = vsub.f32 %v1538, %v1774
  %v1845 = vsub.f32 %v1541, %v1779
  %v1846 = vsub.f32 %v1546, %v1784
  %v1847 = vsub.f32 %v1549, %v1789
  %v1848 = vsub.f32 %v1554, %v1794
  %v1849 = vsub.f32 %v1557, %v1799
  %v1850 = vsub.f32 %v1562, %v1804
  %v1851 = vsub.f32 %v1565, %v1809
  %v1852 = vsub.f32 %v1570, %v1814
  %v1853 = vsub.f32 %v1573, %v1819
  %v1854 = vsub.f32 %v1578, %v1824
  %v1855 = vsub.f32 %v1581, %v1829
  %v1856 = vsub.f32 %v1586, %v1834
  %v1857 = vsub.f32 %v1589, %v1839
  %v1858 = vmul.f32 %v1842, %v1842
  %v1859 = vmul.f32 %v1843, %v1843
  %v1860 = vmul.f32 %v1844, %v1844
  %v1861 = vmul.f32 %v1845, %v1845
  %v1862 = vmul.f32 %v1846, %v1846
  %v1863 = vmul.f32 %v1847, %v1847
  %v1864 = vmul.f32 %v1848, %v1848
  %v1865 = vmul.f32 %v1849, %v1849
  %v1866 = vmul.f32 %v1850, %v1850
  %v1867 = vmul.f32 %v1851, %v1851
  %v1868 = vmul.f32 %v1852, %v1852
  %v1869 = vmul.f32 %v1853, %v1853
  %v1870 = vmul.f32 %v1854, %v1854
  %v1871 = vmul.f32 %v1855, %v1855
  %v1872 = vmul.f32 %v1856, %v1856
  %v1873 = vmul.f32 %v1857, %v1857
  %1890 = vrot.lane.b32.xlu0 %v1764, 112
  %v1891 = vpop.permute.xlu0 %1890
  %1892 = vrot.lane.b32.xlu0 %v1769, 112
  %v1893 = vpop.permute.xlu0 %1892
  %1894 = vrot.lane.b32.xlu0 %v1774, 112
  %v1895 = vpop.permute.xlu0 %1894
  %1896 = vrot.lane.b32.xlu0 %v1779, 112
  %v1897 = vpop.permute.xlu0 %1896
  %1898 = vrot.lane.b32.xlu0 %v1784, 112
  %v1899 = vpop.permute.xlu0 %1898
  %1900 = vrot.lane.b32.xlu0 %v1789, 112
  %v1901 = vpop.permute.xlu0 %1900
  %1902 = vrot.lane.b32.xlu0 %v1794, 112
  %v1903 = vpop.permute.xlu0 %1902
  %1904 = vrot.lane.b32.xlu0 %v1799, 112
  %v1905 = vpop.permute.xlu0 %1904
  %1906 = vrot.lane.b32.xlu0 %v1804, 112
  %v1907 = vpop.permute.xlu0 %1906
  %1908 = vrot.lane.b32.xlu0 %v1809, 112
  %v1909 = vpop.permute.xlu0 %1908
  %1910 = vrot.lane.b32.xlu0 %v1814, 112
  %v1911 = vpop.permute.xlu0 %1910
  %1912 = vrot.lane.b32.xlu0 %v1819, 112
  %v1913 = vpop.permute.xlu0 %1912
  %1914 = vrot.lane.b32.xlu0 %v1824, 112
  %v1915 = vpop.permute.xlu0 %1914
  %1916 = vrot.lane.b32.xlu0 %v1829, 112
  %v1917 = vpop.permute.xlu0 %1916
  %1918 = vrot.lane.b32.xlu0 %v1834, 112
  %v1919 = vpop.permute.xlu0 %1918
  %1920 = vrot.lane.b32.xlu0 %v1839, 112
  %v1921 = vpop.permute.xlu0 %1920
  %v1938 = vsub.f32 %v1764, %v1891
  %v1939 = vsub.f32 %v1769, %v1893
  %v1940 = vsub.f32 %v1774, %v1895
  %v1941 = vsub.f32 %v1779, %v1897
  %v1942 = vsub.f32 %v1784, %v1899
  %v1943 = vsub.f32 %v1789, %v1901
  %v1944 = vsub.f32 %v1794, %v1903
  %v1945 = vsub.f32 %v1799, %v1905
  %v1946 = vsub.f32 %v1804, %v1907
  %v1947 = vsub.f32 %v1809, %v1909
  %v1948 = vsub.f32 %v1814, %v1911
  %v1949 = vsub.f32 %v1819, %v1913
  %v1950 = vsub.f32 %v1824, %v1915
  %v1951 = vsub.f32 %v1829, %v1917
  %v1952 = vsub.f32 %v1834, %v1919
  %v1953 = vsub.f32 %v1839, %v1921
  %v1954 = vmul.f32 %v1938, %v1938
  %v1955 = vmul.f32 %v1939, %v1939
  %v1956 = vmul.f32 %v1940, %v1940
  %v1957 = vmul.f32 %v1941, %v1941
  %v1958 = vmul.f32 %v1942, %v1942
  %v1959 = vmul.f32 %v1943, %v1943
  %v1960 = vmul.f32 %v1944, %v1944
  %v1961 = vmul.f32 %v1945, %v1945
  %v1962 = vmul.f32 %v1946, %v1946
  %v1963 = vmul.f32 %v1947, %v1947
  %v1964 = vmul.f32 %v1948, %v1948
  %v1965 = vmul.f32 %v1949, %v1949
  %v1966 = vmul.f32 %v1950, %v1950
  %v1967 = vmul.f32 %v1951, %v1951
  %v1968 = vmul.f32 %v1952, %v1952
  %v1969 = vmul.f32 %v1953, %v1953
  %v1970 = vlaneseq
  %v1971 = vshrl.u32 %v1970, 7
  %v1972 = vsub.s32 0, %v1971
  %v1973 = vrot.slane %v1684, %v1972
  %v1974 = vsub.f32 %v1530, %v1973
  %v1975 = vsub.f32 %v1533, %v1973
  %v1976 = vsub.f32 %v1538, %v1973
  %v1977 = vsub.f32 %v1541, %v1973
  %v1978 = vsub.f32 %v1546, %v1973
  %v1979 = vsub.f32 %v1549, %v1973
  %v1980 = vsub.f32 %v1554, %v1973
  %v1981 = vsub.f32 %v1557, %v1973
  %v1982 = vsub.f32 %v1562, %v1973
  %v1983 = vsub.f32 %v1565, %v1973
  %v1984 = vsub.f32 %v1570, %v1973
  %v1985 = vsub.f32 %v1573, %v1973
  %v1986 = vsub.f32 %v1578, %v1973
  %v1987 = vsub.f32 %v1581, %v1973
  %v1988 = vsub.f32 %v1586, %v1973
  %v1989 = vsub.f32 %v1589, %v1973
  %v1990 = vmul.f32 %v1974, %v1974
  %v1991 = vmul.f32 %v1975, %v1975
  %v1992 = vmul.f32 %v1976, %v1976
  %v1993 = vmul.f32 %v1977, %v1977
  %v1994 = vmul.f32 %v1978, %v1978
  %v1995 = vmul.f32 %v1979, %v1979
  %v1996 = vmul.f32 %v1980, %v1980
  %v1997 = vmul.f32 %v1981, %v1981
  %v1998 = vmul.f32 %v1982, %v1982
  %v1999 = vmul.f32 %v1983, %v1983
  %v2000 = vmul.f32 %v1984, %v1984
  %v2001 = vmul.f32 %v1985, %v1985
  %v2002 = vmul.f32 %v1986, %v1986
  %v2003 = vmul.f32 %v1987, %v1987
  %v2004 = vmul.f32 %v1988, %v1988
  %v2005 = vmul.f32 %v1989, %v1989
  %2022 = vrot.lane.b32.xlu0 %v1954, 16
  %v2023 = vpop.permute.xlu0 %2022
  %2024 = vrot.lane.b32.xlu0 %v1955, 16
  %v2025 = vpop.permute.xlu0 %2024
  %2026 = vrot.lane.b32.xlu0 %v1956, 16
  %v2027 = vpop.permute.xlu0 %2026
  %2028 = vrot.lane.b32.xlu0 %v1957, 16
  %v2029 = vpop.permute.xlu0 %2028
  %2030 = vrot.lane.b32.xlu0 %v1958, 16
  %v2031 = vpop.permute.xlu0 %2030
  %2032 = vrot.lane.b32.xlu0 %v1959, 16
  %v2033 = vpop.permute.xlu0 %2032
  %2034 = vrot.lane.b32.xlu0 %v1960, 16
  %v2035 = vpop.permute.xlu0 %2034
  %2036 = vrot.lane.b32.xlu0 %v1961, 16
  %v2037 = vpop.permute.xlu0 %2036
  %2038 = vrot.lane.b32.xlu0 %v1962, 16
  %v2039 = vpop.permute.xlu0 %2038
  %2040 = vrot.lane.b32.xlu0 %v1963, 16
  %v2041 = vpop.permute.xlu0 %2040
  %2042 = vrot.lane.b32.xlu0 %v1964, 16
  %v2043 = vpop.permute.xlu0 %2042
  %2044 = vrot.lane.b32.xlu0 %v1965, 16
  %v2045 = vpop.permute.xlu0 %2044
  %2046 = vrot.lane.b32.xlu0 %v1966, 16
  %v2047 = vpop.permute.xlu0 %2046
  %2048 = vrot.lane.b32.xlu0 %v1967, 16
  %v2049 = vpop.permute.xlu0 %2048
  %2050 = vrot.lane.b32.xlu0 %v1968, 16
  %v2051 = vpop.permute.xlu0 %2050
  %2052 = vrot.lane.b32.xlu0 %v1969, 16
  %v2053 = vpop.permute.xlu0 %2052
  %2086 = vrot.lane.b32.xlu0 %v1990, 32
  %v2087 = vpop.permute.xlu0 %2086
  %2088 = vrot.lane.b32.xlu0 %v1991, 32
  %v2089 = vpop.permute.xlu0 %2088
  %2090 = vrot.lane.b32.xlu0 %v1992, 32
  %v2091 = vpop.permute.xlu0 %2090
  %2092 = vrot.lane.b32.xlu0 %v1993, 32
  %v2093 = vpop.permute.xlu0 %2092
  %2094 = vrot.lane.b32.xlu0 %v1994, 32
  %v2095 = vpop.permute.xlu0 %2094
  %2096 = vrot.lane.b32.xlu0 %v1995, 32
  %v2097 = vpop.permute.xlu0 %2096
  %2098 = vrot.lane.b32.xlu0 %v1996, 32
  %v2099 = vpop.permute.xlu0 %2098
  %2100 = vrot.lane.b32.xlu0 %v1997, 32
  %v2101 = vpop.permute.xlu0 %2100
  %2102 = vrot.lane.b32.xlu0 %v1998, 32
  %v2103 = vpop.permute.xlu0 %2102
  %2104 = vrot.lane.b32.xlu0 %v1999, 32
  %v2105 = vpop.permute.xlu0 %2104
  %2106 = vrot.lane.b32.xlu0 %v2000, 32
  %v2107 = vpop.permute.xlu0 %2106
  %2108 = vrot.lane.b32.xlu0 %v2001, 32
  %v2109 = vpop.permute.xlu0 %2108
  %2110 = vrot.lane.b32.xlu0 %v2002, 32
  %v2111 = vpop.permute.xlu0 %2110
  %2112 = vrot.lane.b32.xlu0 %v2003, 32
  %v2113 = vpop.permute.xlu0 %2112
  %2114 = vrot.lane.b32.xlu0 %v2004, 32
  %v2115 = vpop.permute.xlu0 %2114
  %2116 = vrot.lane.b32.xlu0 %v2005, 32
  %v2117 = vpop.permute.xlu0 %2116
  %v2134 = vsel %vm1687, %v1858, %v2023
  %v2135 = vsel %vm1687, %v1859, %v2025
  %v2136 = vsel %vm1687, %v1860, %v2027
  %v2137 = vsel %vm1687, %v1861, %v2029
  %v2138 = vsel %vm1687, %v1862, %v2031
  %v2139 = vsel %vm1687, %v1863, %v2033
  %v2140 = vsel %vm1687, %v1864, %v2035
  %v2141 = vsel %vm1687, %v1865, %v2037
  %v2142 = vsel %vm1687, %v1866, %v2039
  %v2143 = vsel %vm1687, %v1867, %v2041
  %v2144 = vsel %vm1687, %v1868, %v2043
  %v2145 = vsel %vm1687, %v1869, %v2045
  %v2146 = vsel %vm1687, %v1870, %v2047
  %v2147 = vsel %vm1687, %v1871, %v2049
  %v2148 = vsel %vm1687, %v1872, %v2051
  %v2149 = vsel %vm1687, %v1873, %v2053
  %v2150 = vsel %vm574, %v2134, %v2087
  %v2151 = vsel %vm574, %v2135, %v2089
  %v2152 = vsel %vm574, %v2136, %v2091
  %v2153 = vsel %vm574, %v2137, %v2093
  %v2154 = vsel %vm574, %v2138, %v2095
  %v2155 = vsel %vm574, %v2139, %v2097
  %v2156 = vsel %vm574, %v2140, %v2099
  %v2157 = vsel %vm574, %v2141, %v2101
  %v2158 = vsel %vm574, %v2142, %v2103
  %v2159 = vsel %vm574, %v2143, %v2105
  %v2160 = vsel %vm574, %v2144, %v2107
  %v2161 = vsel %vm574, %v2145, %v2109
  %v2162 = vsel %vm574, %v2146, %v2111
  %v2163 = vsel %vm574, %v2147, %v2113
  %v2164 = vsel %vm574, %v2148, %v2115
  %v2165 = vsel %vm574, %v2149, %v2117
  %vm2166 = vcmask 392192
  %v2167 = vsel %vm2166, %v2150, 1.0
  %v2168 = vsel %vm2166, %v2151, 1.0
  %v2169 = vsel %vm2166, %v2152, 1.0
  %v2170 = vsel %vm2166, %v2153, 1.0
  %v2171 = vsel %vm2166, %v2154, 1.0
  %v2172 = vsel %vm2166, %v2155, 1.0
  %v2173 = vsel %vm2166, %v2156, 1.0
  %v2174 = vsel %vm2166, %v2157, 1.0
  %v2175 = vsel %vm2166, %v2158, 1.0
  %v2176 = vsel %vm2166, %v2159, 1.0
  %v2177 = vsel %vm2166, %v2160, 1.0
  %v2178 = vsel %vm2166, %v2161, 1.0
  %v2179 = vsel %vm2166, %v2162, 1.0
  %v2180 = vsel %vm2166, %v2163, 1.0
  %v2181 = vsel %vm2166, %v2164, 1.0
  %v2182 = vsel %vm2166, %v2165, 1.0
  %2183 = vmatprep.subr.mxu0 0.0
  %2184 = vmatpush1.msra.mxu0 %v2167
  %2185 = vmatprep.subr.mxu0 0.0
  %2186 = vmatpush1.msra.mxu0 %v2168
  %2187 = vmatprep.subr.mxu0 0.0
  %2188 = vmatpush1.msra.mxu0 %v2169
  %2189 = vmatprep.subr.mxu0 0.0
  %2190 = vmatpush1.msra.mxu0 %v2170
  %2191 = vmatprep.subr.mxu0 0.0
  %2192 = vmatpush1.msra.mxu0 %v2171
  %2193 = vmatprep.subr.mxu0 0.0
  %2194 = vmatpush1.msra.mxu0 %v2172
  %2195 = vmatprep.subr.mxu0 0.0
  %2196 = vmatpush1.msra.mxu0 %v2173
  %2197 = vmatprep.subr.mxu0 0.0
  %2198 = vmatpush1.msra.mxu0 %v2174
  %2199 = vmatprep.subr.mxu0 0.0
  %2200 = vmatpush1.msra.mxu0 %v2175
  %2201 = vmatprep.subr.mxu0 0.0
  %2202 = vmatpush1.msra.mxu0 %v2176
  %2203 = vmatprep.subr.mxu0 0.0
  %2204 = vmatpush1.msra.mxu0 %v2177
  %2205 = vmatprep.subr.mxu0 0.0
  %2206 = vmatpush1.msra.mxu0 %v2178
  %2207 = vmatprep.subr.mxu0 0.0
  %2208 = vmatpush1.msra.mxu0 %v2179
  %2209 = vmatprep.subr.mxu0 0.0
  %2210 = vmatpush1.msra.mxu0 %v2180
  %2211 = vmatprep.subr.mxu0 0.0
  %2212 = vmatpush1.msra.mxu0 %v2181
  %2213 = vmatprep.subr.mxu0 0.0
  %2214 = vmatpush1.msra.mxu0 %v2182
  %2215 = vmatprep.subr.mxu0 0.0
  %2216 = vmatpush1.msra.mxu0 0.0
  %2217 = vmatprep.subr.mxu0 0.0
  %2218 = vmatpush1.msra.mxu0 0.0
  %2219 = vmatprep.subr.mxu0 0.0
  %2220 = vmatpush1.msra.mxu0 0.0
  %2221 = vmatprep.subr.mxu0 0.0
  %2222 = vmatpush1.msra.mxu0 0.0
  %2223 = vmatprep.subr.mxu0 0.0
  %2224 = vmatpush1.msra.mxu0 0.0
  %2225 = vmatprep.subr.mxu0 0.0
  %2226 = vmatpush1.msra.mxu0 0.0
  %2227 = vmatprep.subr.mxu0 0.0
  %2228 = vmatpush1.msra.mxu0 0.0
  %2229 = vmatprep.subr.mxu0 0.0
  %2230 = vmatpush1.msra.mxu0 0.0
  %2231 = vmatprep.subr.mxu0 0.0
  %2232 = vmatpush1.msra.mxu0 0.0
  %2233 = vmatprep.subr.mxu0 0.0
  %2234 = vmatpush1.msra.mxu0 0.0
  %2235 = vmatprep.subr.mxu0 0.0
  %2236 = vmatpush1.msra.mxu0 0.0
  %2237 = vmatprep.subr.mxu0 0.0
  %2238 = vmatpush1.msra.mxu0 0.0
  %2239 = vmatprep.subr.mxu0 0.0
  %2240 = vmatpush1.msra.mxu0 0.0
  %2241 = vmatprep.subr.mxu0 0.0
  %2242 = vmatpush1.msra.mxu0 0.0
  %2243 = vmatprep.subr.mxu0 0.0
  %2244 = vmatpush1.msra.mxu0 0.0
  %2245 = vmatprep.subr.mxu0 0.0
  %2246 = vmatpush1.msra.mxu0 0.0
  %2247 = vmatprep.mubr.f32.mxu0 0.0
  %2248 = vmatmul.mubr.f32.gmra.mrb[0].mxu0 %v1187
  %v2249 = vpop.f32.mrb[0].mxu0
  %v2250 = vadd.f32 0.0, %v2249
  %v2251 = vpop.f32.mrb[0].mxu0
  %2252 = vmatprep.mubr.f32.mxu0 0.0
  %2253 = vmatmul.mubr.f32.gmra.mrb[0].mxu0 %v1188
  %v2254 = vpop.f32.mrb[0].mxu0
  %v2255 = vadd.f32 0.0, %v2254
  %v2256 = vpop.f32.mrb[0].mxu0
  %2257 = vdwg.mxu0
  %v2258 = vsel %vm1687, %v2250, 0.0
  %2259 = vadd.xlane.f32.xlu0 %v2258
  %v2260 = vpop.xlane.xlu0 %2259
  %2262 = vrot.lane.b32.xlu0 %v2250, 112
  %v2263 = vpop.permute.xlu0 %2262
  %v2265 = vsel %vm1687, %v2263, 0.0
  %2266 = vadd.xlane.f32.xlu0 %v2265
  %v2267 = vpop.xlane.xlu0 %2266
  %2269 = vrot.lane.b32.xlu0 %v2255, 96
  %v2270 = vpop.permute.xlu0 %2269
  %vm2272 = vcmask 122880
  %v2273 = vsel %vm2272, %v2270, 0.0
  %2274 = vadd.xlane.f32.xlu0 %v2273
  %v2275 = vpop.xlane.xlu0 %2274
  %v2276 = vrot.slane %v2275, 4
  %v2277 = vadd.f32 %v2275, %v2276
  %v2278 = vrot.slane %v2277, 2
  %v2279 = vadd.f32 %v2277, %v2278
  %v2280 = vrot.slane %v2279, 1
  %v2281 = vadd.f32 %v2279, %v2280
  %s2282 = vtos %v2281
  %v2283 = vadd.f32 %v2255, 0.0
  %2285 = vrot.lane.b32.xlu0 %v2283, 80
  %v2286 = vpop.permute.xlu0 %2285
  %s2288 = vtos %v2286
  %s2289 = ssub.f32 %s2288, 1.0
  %s2290 = smax.f32 %s2289, 1.0
  %v2291 = vstv %s2290
  %v2292 = vrcp.pop %v2291
  %s2293 = vtos %v2292
  %s2294 = smul.f32 %s2282, %s2293
  %v2295 = vsub.f32 %v2250, 1.0
  %v2296 = vmax.f32 %v2295, 1.0
  %v2297 = vrcp.pop %v2296
  %v2298 = vmul.f32 %v2260, %v2297
  %v2299 = vmul.f32 %v2267, %v2297
  %v2300 = vstv %s2294
  %v2301 = vsub.f32 %v2300, %v2299
  %v2302 = vmax.f32 %v2298, 1e-06
  %v2303 = vrcp.pop %v2302
  %v2304 = vmul.f32 %v2301, %v2303
  %vm2305 = vcmp.gt.f32.partialorder %v2304, 0.0
  %v2306 = vmax.f32 %v2304, 0.0
  %v2307 = vrsqrt.pop %v2306
  %v2308 = vmul.f32 %v2306, %v2307
  %vm2309 = vcmp.eq.f32.partialorder %v2306, inf
  %v2310 = vsel %vm2309, %v2306, %v2308
  %vm2311 = vcmp.eq.f32.partialorder %v2306, 0.0
  %v2312 = vand.u32 %v2306, 2147483648
  %v2313 = vsel %vm2311, %v2312, %v2310
  %v2314 = vsel %vm2305, %v2313, 0.0
  %v2315 = vsel %vm1687, %v1530, 0.0
  %v2316 = vsel %vm1687, %v1533, 0.0
  %v2317 = vsel %vm1687, %v1538, 0.0
  %v2318 = vsel %vm1687, %v1541, 0.0
  %v2319 = vsel %vm1687, %v1546, 0.0
  %v2320 = vsel %vm1687, %v1549, 0.0
  %v2321 = vsel %vm1687, %v1554, 0.0
  %v2322 = vsel %vm1687, %v1557, 0.0
  %v2323 = vsel %vm1687, %v1562, 0.0
  %v2324 = vsel %vm1687, %v1565, 0.0
  %v2325 = vsel %vm1687, %v1570, 0.0
  %v2326 = vsel %vm1687, %v1573, 0.0
  %v2327 = vsel %vm1687, %v1578, 0.0
  %v2328 = vsel %vm1687, %v1581, 0.0
  %v2329 = vsel %vm1687, %v1586, 0.0
  %v2330 = vsel %vm1687, %v1589, 0.0
  %2331 = vst [vmem:[%s7] sm:$0xff] %v2315
  %2332 = vst [vmem:[%s7 + $0x8] sm:$0xff] %v2316
  %2333 = vst [vmem:[%s7 + $0x10] sm:$0xff] %v2317
  %2334 = vst [vmem:[%s7 + $0x18] sm:$0xff] %v2318
  %2335 = vst [vmem:[%s7 + $0x20] sm:$0xff] %v2319
  %2336 = vst [vmem:[%s7 + $0x28] sm:$0xff] %v2320
  %2337 = vst [vmem:[%s7 + $0x30] sm:$0xff] %v2321
  %2338 = vst [vmem:[%s7 + $0x38] sm:$0xff] %v2322
  %2339 = vst [vmem:[%s7 + $0x40] sm:$0xff] %v2323
  %2340 = vst [vmem:[%s7 + $0x48] sm:$0xff] %v2324
  %2341 = vst [vmem:[%s7 + $0x50] sm:$0xff] %v2325
  %2342 = vst [vmem:[%s7 + $0x58] sm:$0xff] %v2326
  %2343 = vst [vmem:[%s7 + $0x60] sm:$0xff] %v2327
  %2344 = vst [vmem:[%s7 + $0x68] sm:$0xff] %v2328
  %2345 = vst [vmem:[%s7 + $0x70] sm:$0xff] %v2329
  %2346 = vst [vmem:[%s7 + $0x78] sm:$0xff] %v2330
  %2348 = vrot.lane.b32.xlu0 %v1334, 32
  %v2349 = vpop.permute.xlu0 %2348
  %2352 = vrot.lane.b32.xlu0 %v2314, 81
  %v2353 = vpop.permute.xlu0 %2352
  %vm2355 = vcmask 7168
  %v2356 = vsel %vm2355, %v2349, %v2353
  %vm2357 = vcmask 15360
  %2358 = vst.msk [vmem:[%s8] sm:$0xff] %vm2357, %v2356
  // Predicated region
  $region30: #{gcn2_forward.1} parent=0 // pred_check
    _
  $region31: #{gcn2_forward.1} parent=0 // pred_check_branch
    %2360 = sbr.rel (0) target = $region33
  $region32: #{gcn2_forward.1} parent=0 // pred_region
    _
  $region33: #{gcn2_forward.1} parent=0 // pred_fallthru
    _
  // Predicated region
  $region34: #{gcn2_forward.1} parent=0 // pred_check
    _
  $region35: #{gcn2_forward.1} parent=0 // pred_check_branch
    %2362 = sbr.rel (0) target = $region37
  $region36: #{gcn2_forward.1} parent=0 // pred_region
    _
  $region37: #{gcn2_forward.1} parent=0 // pred_fallthru
    _
  // Predicated region
  $region38: #{gcn2_forward.1} parent=0 // pred_check
    _
  $region39: #{gcn2_forward.1} parent=0 // pred_check_branch
    %2364 = sbr.rel (0) target = $region41
  $region40: #{gcn2_forward.1} parent=0 // pred_region
    _
  $region41: #{gcn2_forward.1} parent=0 // pred_fallthru
    _
  // Predicated region
  $region42: #{gcn2_forward.1} parent=0 // pred_check
    _
  $region43: #{gcn2_forward.1} parent=0 // pred_check_branch
    %2366 = sbr.rel (0) target = $region45
  $region44: #{gcn2_forward.1} parent=0 // pred_region
    _
  $region45: #{gcn2_forward.1} parent=0 // pred_fallthru
    _

</llo_original>
